<compile_context>
chip_gen: v5e
topology: v5e:2x2
jax: 0.10.0
libtpu: 0.0.40
codegen_flags: <defaults>
</compile_context>

<pallas_src>
import functools

import jax
import jax.numpy as jnp
from jax.experimental import pallas as pl
from jax.experimental.pallas import tpu as pltpu


# ----------------------------- Pallas kernels ------------------------------


def _gemm_t_kernel(w_ref, x_ref, b_ref, o_ref, *, act):
    # y = act(W @ X + b), W: (O, K) bf16, X: (K, tile_M) bf16, b: (O, 1) f32.
    # Output (O, tile_M): tile_M (multiple of 128) on lanes -> dense stores.
    y = jnp.dot(w_ref[...], x_ref[...], preferred_element_type=jnp.float32)
    y = y + b_ref[...]
    if act == "relu":
        y = jnp.maximum(y, 0.0)
    elif act == "tanh":
        y = jnp.tanh(y)
    o_ref[...] = y.astype(o_ref.dtype)


def _max4_kernel(a_ref, b_ref, c_ref, d_ref, o_ref):
    # Elementwise max of the four 2x2-window corners, on a lane-dense (1, L) view.
    o_ref[...] = jnp.maximum(jnp.maximum(a_ref[...], b_ref[...]),
                             jnp.maximum(c_ref[...], d_ref[...]))


def _mlp_kernel(x_ref, w3_ref, b3_ref, w4_ref, b4_ref, w5_ref, b5_ref, o_ref):
    # Fused FC tail: relu(x@W3+b3) -> relu(.@W4+b4) -> tanh(.@W5+b5).
    # Intermediates never leave VMEM/vregs; f32 accumulation, bf16 MXU inputs.
    h = jnp.dot(x_ref[...], w3_ref[...], preferred_element_type=jnp.float32) + b3_ref[...]
    h = jnp.maximum(h, 0.0).astype(w4_ref.dtype)
    h = jnp.dot(h, w4_ref[...], preferred_element_type=jnp.float32) + b4_ref[...]
    h = jnp.maximum(h, 0.0).astype(w5_ref.dtype)
    y = jnp.dot(h, w5_ref[...], preferred_element_type=jnp.float32) + b5_ref[...]
    o_ref[...] = jnp.tanh(y).astype(o_ref.dtype)


# ----------------------------- Pallas wrappers ------------------------------


def gemm_t_bias_act(w, x, b, act="none", out_dtype=jnp.bfloat16, tile_m=512):
    """y = act(w @ x + b[:, None]); w: (O, K), x: (K, M) -> (O, M), gridded over M."""
    O, K = w.shape
    K2, M = x.shape
    assert K == K2
    tm = M if M <= tile_m else tile_m           # tile_m is a multiple of 128
    grid = (pl.cdiv(M, tm),)
    flops = 2 * M * K * O
    bytes_accessed = ((O * K + K * M) * x.dtype.itemsize
                      + O * 4
                      + O * M * jnp.dtype(out_dtype).itemsize)
    return pl.pallas_call(
        functools.partial(_gemm_t_kernel, act=act),
        out_shape=jax.ShapeDtypeStruct((O, M), out_dtype),
        grid=grid,
        in_specs=[
            pl.BlockSpec((O, K), lambda i: (0, 0)),    # weights resident across grid
            pl.BlockSpec((K, tm), lambda i: (0, i)),
            pl.BlockSpec((O, 1), lambda i: (0, 0)),
        ],
        out_specs=pl.BlockSpec((O, tm), lambda i: (0, i)),
        compiler_params=pltpu.CompilerParams(
            dimension_semantics=("parallel",),
            vmem_limit_bytes=32 * 1024 * 1024),
        cost_estimate=pl.CostEstimate(flops=flops, transcendentals=0,
                                      bytes_accessed=bytes_accessed),
    )(w, x, b.reshape(O, 1).astype(jnp.float32))


def maxpool_2x2_cnhw(x):
    """2x2/stride-2 max pool on a (C, N, H, W) activation; returns (C, N, H//2, W//2)."""
    C, N, H, W = x.shape
    assert H % 2 == 0 and W % 2 == 0, "maxpool_2x2 expects even H and W"
    Ho, Wo = H // 2, W // 2
    L = C * N * Ho * Wo
    corners = (x[:, :, 0::2, 0::2], x[:, :, 0::2, 1::2],
               x[:, :, 1::2, 0::2], x[:, :, 1::2, 1::2])
    flat = [c.reshape(1, L) for c in corners]   # lane-dense view; pure elementwise max
    tl = L if L <= 16384 else 16384             # 16384 % 128 == 0
    grid = (pl.cdiv(L, tl),)
    out = pl.pallas_call(
        _max4_kernel,
        out_shape=jax.ShapeDtypeStruct((1, L), x.dtype),
        grid=grid,
        in_specs=[pl.BlockSpec((1, tl), lambda i: (0, i)) for _ in range(4)],
        out_specs=pl.BlockSpec((1, tl), lambda i: (0, i)),
        compiler_params=pltpu.CompilerParams(dimension_semantics=("parallel",)),
    )(*flat)
    return out.reshape(C, N, Ho, Wo)


def mlp_tail(x, w3, b3, w4, b4, w5, b5, tile_n=256):
    """Fused 400->150->84->out MLP (relu, relu, tanh). x: (N, 400) bf16 -> (N, out) f32."""
    N, K = x.shape
    F3 = w3.shape[1]
    F4 = w4.shape[1]
    F5 = w5.shape[1]
    tn = N if N <= tile_n else tile_n
    grid = (pl.cdiv(N, tn),)
    return pl.pallas_call(
        _mlp_kernel,
        out_shape=jax.ShapeDtypeStruct((N, F5), jnp.float32),
        grid=grid,
        in_specs=[
            pl.BlockSpec((tn, K), lambda i: (i, 0)),
            pl.BlockSpec((K, F3), lambda i: (0, 0)),
            pl.BlockSpec((1, F3), lambda i: (0, 0)),
            pl.BlockSpec((F3, F4), lambda i: (0, 0)),
            pl.BlockSpec((1, F4), lambda i: (0, 0)),
            pl.BlockSpec((F4, F5), lambda i: (0, 0)),
            pl.BlockSpec((1, F5), lambda i: (0, 0)),
        ],
        out_specs=pl.BlockSpec((tn, F5), lambda i: (i, 0)),
        compiler_params=pltpu.CompilerParams(
            dimension_semantics=("parallel",),
            vmem_limit_bytes=32 * 1024 * 1024),
    )(x,
      w3, b3.reshape(1, F3).astype(jnp.float32),
      w4, b4.reshape(1, F4).astype(jnp.float32),
      w5, b5.reshape(1, F5).astype(jnp.float32))


# ----------------------------- JAX glue -------------------------------------


def _im2col_t(x_cnhw, k):
    # x: (C, N, H, W) -> patches^T (C*k*k, N*Ho*Wo); row order (c, kh, kw) matches
    # PyTorch conv weight (O, C, kH, kW).reshape(O, C*k*k).
    C, N, H, W = x_cnhw.shape
    Ho, Wo = H - k + 1, W - k + 1
    cols = []
    for i in range(k):
        for j in range(k):
            cols.append(x_cnhw[:, :, i:i + Ho, j:j + Wo])
    p = jnp.stack(cols, axis=1)                       # (C, k*k, N, Ho, Wo)
    return p.reshape(C * k * k, N * Ho * Wo), (N, Ho, Wo)


def conv2d_relu_t(x_cnhw, w_flat, b, k, out_dtype=jnp.bfloat16):
    # Valid conv (stride 1) + bias + ReLU, in (C, N, H, W) layout end-to-end.
    patches, (N, Ho, Wo) = _im2col_t(x_cnhw, k)
    O = w_flat.shape[0]
    y = gemm_t_bias_act(w_flat, patches, b, act="relu", out_dtype=out_dtype)
    return y.reshape(O, N, Ho, Wo)


def init_params(key, out_feats):
    # Deterministic PyTorch-like uniform(-1/sqrt(fan_in), 1/sqrt(fan_in)) init (PyTorch shapes).
    ks = jax.random.split(key, 10)

    def u(k, shape, fan_in):
        bound = 1.0 / float(fan_in) ** 0.5
        return jax.random.uniform(k, shape, jnp.float32, -bound, bound)

    return {
        "w1": u(ks[0], (6, 3, 5, 5), 3 * 25),
        "b1": u(ks[1], (6,), 3 * 25),
        "w2": u(ks[2], (16, 6, 5, 5), 6 * 25),
        "b2": u(ks[3], (16,), 6 * 25),
        "w3": u(ks[4], (150, 16 * 5 * 5), 16 * 5 * 5),
        "b3": u(ks[5], (150,), 16 * 5 * 5),
        "w4": u(ks[6], (84, 150), 150),
        "b4": u(ks[7], (84,), 150),
        "w5": u(ks[8], (out_feats, 84), 84),
        "b5": u(ks[9], (out_feats,), 84),
    }


def prepare_params(params):
    # One-time (offline) weight repack: conv weights flattened to (O, C*k*k),
    # FC weights pre-transposed to (in, out), all MXU inputs cast to bf16.
    return {
        "w1": params["w1"].reshape(params["w1"].shape[0], -1).astype(jnp.bfloat16),
        "b1": params["b1"].astype(jnp.float32),
        "w2": params["w2"].reshape(params["w2"].shape[0], -1).astype(jnp.bfloat16),
        "b2": params["b2"].astype(jnp.float32),
        "w3": params["w3"].T.astype(jnp.bfloat16),    # (400, 150)
        "b3": params["b3"].astype(jnp.float32),
        "w4": params["w4"].T.astype(jnp.bfloat16),    # (150, 84)
        "b4": params["b4"].astype(jnp.float32),
        "w5": params["w5"].T.astype(jnp.bfloat16),    # (84, out_feats)
        "b5": params["b5"].astype(jnp.float32),
    }


def base_forward(prepped, features_nchw):
    # features_nchw: (N, 3, 32, 32) float32, PyTorch NCHW convention.
    # Internal activation layout is (C, N, H, W); only boundary transposes are tiny.
    x = jnp.transpose(features_nchw, (1, 0, 2, 3)).astype(jnp.bfloat16)   # (3, N, 32, 32)
    x = conv2d_relu_t(x, prepped["w1"], prepped["b1"], 5)                 # (6, N, 28, 28)
    x = maxpool_2x2_cnhw(x)                                               # (6, N, 14, 14)
    x = conv2d_relu_t(x, prepped["w2"], prepped["b2"], 5)                 # (16, N, 10, 10)
    x = maxpool_2x2_cnhw(x)                                               # (16, N, 5, 5)
    # Match PyTorch `x.view(-1, 16*5*5)`: per-sample features in (c, h, w) order.
    n = x.shape[1]
    xf = jnp.transpose(x, (1, 0, 2, 3)).reshape(n, 16 * 5 * 5)            # (N, 400) bf16
    return mlp_tail(xf, prepped["w3"], prepped["b3"],
                    prepped["w4"], prepped["b4"],
                    prepped["w5"], prepped["b5"])                         # (N, out_feats) f32


if __name__ == "__main__":
    key = jax.random.PRNGKey(0)
    pkey, xkey = jax.random.split(key)
    out_feats = 10
    params = init_params(pkey, out_feats)
    prepped = prepare_params(params)

    # CIFAR-sized input is required by the hard-coded 16*5*5 flatten in the module.
    features = jax.random.normal(xkey, (2, 3, 32, 32), jnp.float32)

    out = jax.jit(base_forward)(prepped, features)
    out = jax.block_until_ready(out)
    assert out.shape == (2, out_feats)
    assert bool(jnp.all(jnp.isfinite(out)))
    assert bool(jnp.all(jnp.abs(out) <= 1.0))  # tanh output range
    print("KERNEL_OK")
</pallas_src>

<mosaic_0001>
module attributes {stable_mosaic.version = 11 : i64} {
  func.func @_gemm_t_kernel(%arg0: i32, %arg1: memref<6x75xbf16, #tpu.memory_space<vmem>>, %arg2: memref<75x512xbf16, #tpu.memory_space<vmem>>, %arg3: memref<6x1xf32, #tpu.memory_space<vmem>>, %arg4: memref<6x512xbf16, #tpu.memory_space<vmem>>) attributes {dimension_semantics = [#tpu.dimension_semantics<parallel>], iteration_bounds = array<i64: 4>, scalar_prefetch = 0 : i64, scratch_operands = 0 : i64, tpu.core_type = #tpu.core_type<tc>, window_params = [{pipeline_mode = #tpu.pipeline_mode<synchronous>, transform_indices = @transform_0, window_bounds = array<i64: 6, 75>}, {transform_indices = @transform_1, window_bounds = array<i64: 75, 512>}, {pipeline_mode = #tpu.pipeline_mode<synchronous>, transform_indices = @transform_2, window_bounds = array<i64: 6, 1>}, {transform_indices = @transform_3, window_bounds = array<i64: 6, 512>}]} {
    %c0 = arith.constant 0 : index
    %c0_0 = arith.constant 0 : index
    %0 = vector.load %arg1[%c0, %c0_0] : memref<6x75xbf16, #tpu.memory_space<vmem>>, vector<6x75xbf16>
    %c0_1 = arith.constant 0 : index
    %c0_2 = arith.constant 0 : index
    %1 = vector.load %arg2[%c0_1, %c0_2] : memref<75x512xbf16, #tpu.memory_space<vmem>>, vector<75x512xbf16>
    %cst = arith.constant dense<0.000000e+00> : vector<6x512xf32>
    %2 = tpu.matmul %0, %1, %cst {dimension_numbers = #tpu.dot_dimension_numbers<[1], [0], [0], [1], [0, 0, 1, 1], [], []>} : vector<6x75xbf16>, vector<75x512xbf16>, vector<6x512xf32> -> vector<6x512xf32>
    %c0_3 = arith.constant 0 : index
    %c0_4 = arith.constant 0 : index
    %3 = vector.load %arg3[%c0_3, %c0_4] : memref<6x1xf32, #tpu.memory_space<vmem>>, vector<6x1xf32>
    %4 = vector.broadcast %3 : vector<6x1xf32> to vector<6x512xf32>
    %5 = arith.addf %2, %4 : vector<6x512xf32>
    %cst_5 = arith.constant 0.000000e+00 : f32
    %6 = vector.broadcast %cst_5 : f32 to vector<6x512xf32>
    %7 = arith.maximumf %5, %6 : vector<6x512xf32>
    %8 = arith.truncf %7 : vector<6x512xf32> to vector<6x512xbf16>
    %c0_6 = arith.constant 0 : index
    %c0_7 = arith.constant 0 : index
    %9 = vector.load %arg4[%c0_6, %c0_7] : memref<6x512xbf16, #tpu.memory_space<vmem>>, vector<6x512xbf16>
    tpu.vector_store %arg4[%c0_6, %c0_7], %8 {strides = array<i32>} : memref<6x512xbf16, #tpu.memory_space<vmem>>, vector<6x512xbf16>,
    return
  }
  func.func @transform_0(%arg0: i32) -> (i32, i32) {
    %c0_i32 = arith.constant 0 : i32
    %c0_i32_0 = arith.constant 0 : i32
    %c0_i32_1 = arith.constant 0 : i32
    return %c0_i32, %c0_i32_0 : i32, i32
  }
  func.func @transform_1(%arg0: i32) -> (i32, i32) {
    %c0_i32 = arith.constant 0 : i32
    %c0_i32_0 = arith.constant 0 : i32
    return %c0_i32, %arg0 : i32, i32
  }
  func.func @transform_2(%arg0: i32) -> (i32, i32) {
    %c0_i32 = arith.constant 0 : i32
    %c0_i32_0 = arith.constant 0 : i32
    %c0_i32_1 = arith.constant 0 : i32
    return %c0_i32, %c0_i32_0 : i32, i32
  }
  func.func @transform_3(%arg0: i32) -> (i32, i32) {
    %c0_i32 = arith.constant 0 : i32
    %c0_i32_0 = arith.constant 0 : i32
    return %c0_i32, %arg0 : i32, i32
  }
}

module attributes {stable_mosaic.version = 11 : i64} {
  func.func @_max4_kernel(%arg0: i32, %arg1: memref<1x2352xbf16, #tpu.memory_space<vmem>>, %arg2: memref<1x2352xbf16, #tpu.memory_space<vmem>>, %arg3: memref<1x2352xbf16, #tpu.memory_space<vmem>>, %arg4: memref<1x2352xbf16, #tpu.memory_space<vmem>>, %arg5: memref<1x2352xbf16, #tpu.memory_space<vmem>>) attributes {dimension_semantics = [#tpu.dimension_semantics<parallel>], iteration_bounds = array<i64: 1>, scalar_prefetch = 0 : i64, scratch_operands = 0 : i64, tpu.core_type = #tpu.core_type<tc>, window_params = [{transform_indices = @transform_0, window_bounds = array<i64: 1, 2352>}, {transform_indices = @transform_1, window_bounds = array<i64: 1, 2352>}, {transform_indices = @transform_2, window_bounds = array<i64: 1, 2352>}, {transform_indices = @transform_3, window_bounds = array<i64: 1, 2352>}, {transform_indices = @transform_4, window_bounds = array<i64: 1, 2352>}]} {
    %c0 = arith.constant 0 : index
    %c0_0 = arith.constant 0 : index
    %0 = vector.load %arg1[%c0, %c0_0] : memref<1x2352xbf16, #tpu.memory_space<vmem>>, vector<1x2352xbf16>
    %c0_1 = arith.constant 0 : index
    %c0_2 = arith.constant 0 : index
    %1 = vector.load %arg2[%c0_1, %c0_2] : memref<1x2352xbf16, #tpu.memory_space<vmem>>, vector<1x2352xbf16>
    %2 = arith.maximumf %0, %1 : vector<1x2352xbf16>
    %c0_3 = arith.constant 0 : index
    %c0_4 = arith.constant 0 : index
    %3 = vector.load %arg3[%c0_3, %c0_4] : memref<1x2352xbf16, #tpu.memory_space<vmem>>, vector<1x2352xbf16>
    %c0_5 = arith.constant 0 : index
    %c0_6 = arith.constant 0 : index
    %4 = vector.load %arg4[%c0_5, %c0_6] : memref<1x2352xbf16, #tpu.memory_space<vmem>>, vector<1x2352xbf16>
    %5 = arith.maximumf %3, %4 : vector<1x2352xbf16>
    %6 = arith.maximumf %2, %5 : vector<1x2352xbf16>
    %c0_7 = arith.constant 0 : index
    %c0_8 = arith.constant 0 : index
    %7 = vector.load %arg5[%c0_7, %c0_8] : memref<1x2352xbf16, #tpu.memory_space<vmem>>, vector<1x2352xbf16>
    tpu.vector_store %arg5[%c0_7, %c0_8], %6 {strides = array<i32>} : memref<1x2352xbf16, #tpu.memory_space<vmem>>, vector<1x2352xbf16>,
    return
  }
  func.func @transform_0(%arg0: i32) -> (i32, i32) {
    %c0_i32 = arith.constant 0 : i32
    %c0_i32_0 = arith.constant 0 : i32
    return %c0_i32, %arg0 : i32, i32
  }
  func.func @transform_1(%arg0: i32) -> (i32, i32) {
    %c0_i32 = arith.constant 0 : i32
    %c0_i32_0 = arith.constant 0 : i32
    return %c0_i32, %arg0 : i32, i32
  }
  func.func @transform_2(%arg0: i32) -> (i32, i32) {
    %c0_i32 = arith.constant 0 : i32
    %c0_i32_0 = arith.constant 0 : i32
    return %c0_i32, %arg0 : i32, i32
  }
  func.func @transform_3(%arg0: i32) -> (i32, i32) {
    %c0_i32 = arith.constant 0 : i32
    %c0_i32_0 = arith.constant 0 : i32
    return %c0_i32, %arg0 : i32, i32
  }
  func.func @transform_4(%arg0: i32) -> (i32, i32) {
    %c0_i32 = arith.constant 0 : i32
    %c0_i32_0 = arith.constant 0 : i32
    return %c0_i32, %arg0 : i32, i32
  }
}

module attributes {stable_mosaic.version = 11 : i64} {
  func.func @_gemm_t_kernel(%arg0: i32, %arg1: memref<16x150xbf16, #tpu.memory_space<vmem>>, %arg2: memref<150x200xbf16, #tpu.memory_space<vmem>>, %arg3: memref<16x1xf32, #tpu.memory_space<vmem>>, %arg4: memref<16x200xbf16, #tpu.memory_space<vmem>>) attributes {dimension_semantics = [#tpu.dimension_semantics<parallel>], iteration_bounds = array<i64: 1>, scalar_prefetch = 0 : i64, scratch_operands = 0 : i64, tpu.core_type = #tpu.core_type<tc>, window_params = [{pipeline_mode = #tpu.pipeline_mode<synchronous>, transform_indices = @transform_0, window_bounds = array<i64: 16, 150>}, {transform_indices = @transform_1, window_bounds = array<i64: 150, 200>}, {pipeline_mode = #tpu.pipeline_mode<synchronous>, transform_indices = @transform_2, window_bounds = array<i64: 16, 1>}, {transform_indices = @transform_3, window_bounds = array<i64: 16, 200>}]} {
    %c0 = arith.constant 0 : index
    %c0_0 = arith.constant 0 : index
    %0 = vector.load %arg1[%c0, %c0_0] : memref<16x150xbf16, #tpu.memory_space<vmem>>, vector<16x150xbf16>
    %c0_1 = arith.constant 0 : index
    %c0_2 = arith.constant 0 : index
    %1 = vector.load %arg2[%c0_1, %c0_2] : memref<150x200xbf16, #tpu.memory_space<vmem>>, vector<150x200xbf16>
    %cst = arith.constant dense<0.000000e+00> : vector<16x200xf32>
    %2 = tpu.matmul %0, %1, %cst {dimension_numbers = #tpu.dot_dimension_numbers<[1], [0], [0], [1], [0, 0, 1, 1], [], []>} : vector<16x150xbf16>, vector<150x200xbf16>, vector<16x200xf32> -> vector<16x200xf32>
    %c0_3 = arith.constant 0 : index
    %c0_4 = arith.constant 0 : index
    %3 = vector.load %arg3[%c0_3, %c0_4] : memref<16x1xf32, #tpu.memory_space<vmem>>, vector<16x1xf32>
    %4 = vector.broadcast %3 : vector<16x1xf32> to vector<16x200xf32>
    %5 = arith.addf %2, %4 : vector<16x200xf32>
    %cst_5 = arith.constant 0.000000e+00 : f32
    %6 = vector.broadcast %cst_5 : f32 to vector<16x200xf32>
    %7 = arith.maximumf %5, %6 : vector<16x200xf32>
    %8 = arith.truncf %7 : vector<16x200xf32> to vector<16x200xbf16>
    %c0_6 = arith.constant 0 : index
    %c0_7 = arith.constant 0 : index
    %9 = vector.load %arg4[%c0_6, %c0_7] : memref<16x200xbf16, #tpu.memory_space<vmem>>, vector<16x200xbf16>
    tpu.vector_store %arg4[%c0_6, %c0_7], %8 {strides = array<i32>} : memref<16x200xbf16, #tpu.memory_space<vmem>>, vector<16x200xbf16>,
    return
  }
  func.func @transform_0(%arg0: i32) -> (i32, i32) {
    %c0_i32 = arith.constant 0 : i32
    %c0_i32_0 = arith.constant 0 : i32
    %c0_i32_1 = arith.constant 0 : i32
    return %c0_i32, %c0_i32_0 : i32, i32
  }
  func.func @transform_1(%arg0: i32) -> (i32, i32) {
    %c0_i32 = arith.constant 0 : i32
    %c0_i32_0 = arith.constant 0 : i32
    return %c0_i32, %arg0 : i32, i32
  }
  func.func @transform_2(%arg0: i32) -> (i32, i32) {
    %c0_i32 = arith.constant 0 : i32
    %c0_i32_0 = arith.constant 0 : i32
    %c0_i32_1 = arith.constant 0 : i32
    return %c0_i32, %c0_i32_0 : i32, i32
  }
  func.func @transform_3(%arg0: i32) -> (i32, i32) {
    %c0_i32 = arith.constant 0 : i32
    %c0_i32_0 = arith.constant 0 : i32
    return %c0_i32, %arg0 : i32, i32
  }
}

module attributes {stable_mosaic.version = 11 : i64} {
  func.func @_max4_kernel(%arg0: i32, %arg1: memref<1x800xbf16, #tpu.memory_space<vmem>>, %arg2: memref<1x800xbf16, #tpu.memory_space<vmem>>, %arg3: memref<1x800xbf16, #tpu.memory_space<vmem>>, %arg4: memref<1x800xbf16, #tpu.memory_space<vmem>>, %arg5: memref<1x800xbf16, #tpu.memory_space<vmem>>) attributes {dimension_semantics = [#tpu.dimension_semantics<parallel>], iteration_bounds = array<i64: 1>, scalar_prefetch = 0 : i64, scratch_operands = 0 : i64, tpu.core_type = #tpu.core_type<tc>, window_params = [{transform_indices = @transform_0, window_bounds = array<i64: 1, 800>}, {transform_indices = @transform_1, window_bounds = array<i64: 1, 800>}, {transform_indices = @transform_2, window_bounds = array<i64: 1, 800>}, {transform_indices = @transform_3, window_bounds = array<i64: 1, 800>}, {transform_indices = @transform_4, window_bounds = array<i64: 1, 800>}]} {
    %c0 = arith.constant 0 : index
    %c0_0 = arith.constant 0 : index
    %0 = vector.load %arg1[%c0, %c0_0] : memref<1x800xbf16, #tpu.memory_space<vmem>>, vector<1x800xbf16>
    %c0_1 = arith.constant 0 : index
    %c0_2 = arith.constant 0 : index
    %1 = vector.load %arg2[%c0_1, %c0_2] : memref<1x800xbf16, #tpu.memory_space<vmem>>, vector<1x800xbf16>
    %2 = arith.maximumf %0, %1 : vector<1x800xbf16>
    %c0_3 = arith.constant 0 : index
    %c0_4 = arith.constant 0 : index
    %3 = vector.load %arg3[%c0_3, %c0_4] : memref<1x800xbf16, #tpu.memory_space<vmem>>, vector<1x800xbf16>
    %c0_5 = arith.constant 0 : index
    %c0_6 = arith.constant 0 : index
    %4 = vector.load %arg4[%c0_5, %c0_6] : memref<1x800xbf16, #tpu.memory_space<vmem>>, vector<1x800xbf16>
    %5 = arith.maximumf %3, %4 : vector<1x800xbf16>
    %6 = arith.maximumf %2, %5 : vector<1x800xbf16>
    %c0_7 = arith.constant 0 : index
    %c0_8 = arith.constant 0 : index
    %7 = vector.load %arg5[%c0_7, %c0_8] : memref<1x800xbf16, #tpu.memory_space<vmem>>, vector<1x800xbf16>
    tpu.vector_store %arg5[%c0_7, %c0_8], %6 {strides = array<i32>} : memref<1x800xbf16, #tpu.memory_space<vmem>>, vector<1x800xbf16>,
    return
  }
  func.func @transform_0(%arg0: i32) -> (i32, i32) {
    %c0_i32 = arith.constant 0 : i32
    %c0_i32_0 = arith.constant 0 : i32
    return %c0_i32, %arg0 : i32, i32
  }
  func.func @transform_1(%arg0: i32) -> (i32, i32) {
    %c0_i32 = arith.constant 0 : i32
    %c0_i32_0 = arith.constant 0 : i32
    return %c0_i32, %arg0 : i32, i32
  }
  func.func @transform_2(%arg0: i32) -> (i32, i32) {
    %c0_i32 = arith.constant 0 : i32
    %c0_i32_0 = arith.constant 0 : i32
    return %c0_i32, %arg0 : i32, i32
  }
  func.func @transform_3(%arg0: i32) -> (i32, i32) {
    %c0_i32 = arith.constant 0 : i32
    %c0_i32_0 = arith.constant 0 : i32
    return %c0_i32, %arg0 : i32, i32
  }
  func.func @transform_4(%arg0: i32) -> (i32, i32) {
    %c0_i32 = arith.constant 0 : i32
    %c0_i32_0 = arith.constant 0 : i32
    return %c0_i32, %arg0 : i32, i32
  }
}

module attributes {stable_mosaic.version = 11 : i64} {
  func.func @_mlp_kernel(%arg0: i32, %arg1: memref<2x400xbf16, #tpu.memory_space<vmem>>, %arg2: memref<400x150xbf16, #tpu.memory_space<vmem>>, %arg3: memref<1x150xf32, #tpu.memory_space<vmem>>, %arg4: memref<150x84xbf16, #tpu.memory_space<vmem>>, %arg5: memref<1x84xf32, #tpu.memory_space<vmem>>, %arg6: memref<84x10xbf16, #tpu.memory_space<vmem>>, %arg7: memref<1x10xf32, #tpu.memory_space<vmem>>, %arg8: memref<2x10xf32, #tpu.memory_space<vmem>>) attributes {dimension_semantics = [#tpu.dimension_semantics<parallel>], iteration_bounds = array<i64: 1>, scalar_prefetch = 0 : i64, scratch_operands = 0 : i64, tpu.core_type = #tpu.core_type<tc>, window_params = [{transform_indices = @transform_0, window_bounds = array<i64: 2, 400>}, {pipeline_mode = #tpu.pipeline_mode<synchronous>, transform_indices = @transform_1, window_bounds = array<i64: 400, 150>}, {pipeline_mode = #tpu.pipeline_mode<synchronous>, transform_indices = @transform_2, window_bounds = array<i64: 1, 150>}, {pipeline_mode = #tpu.pipeline_mode<synchronous>, transform_indices = @transform_3, window_bounds = array<i64: 150, 84>}, {pipeline_mode = #tpu.pipeline_mode<synchronous>, transform_indices = @transform_4, window_bounds = array<i64: 1, 84>}, {pipeline_mode = #tpu.pipeline_mode<synchronous>, transform_indices = @transform_5, window_bounds = array<i64: 84, 10>}, {pipeline_mode = #tpu.pipeline_mode<synchronous>, transform_indices = @transform_6, window_bounds = array<i64: 1, 10>}, {transform_indices = @transform_7, window_bounds = array<i64: 2, 10>}]} {
    %c0 = arith.constant 0 : index
    %c0_0 = arith.constant 0 : index
    %0 = vector.load %arg1[%c0, %c0_0] : memref<2x400xbf16, #tpu.memory_space<vmem>>, vector<2x400xbf16>
    %c0_1 = arith.constant 0 : index
    %c0_2 = arith.constant 0 : index
    %1 = vector.load %arg2[%c0_1, %c0_2] : memref<400x150xbf16, #tpu.memory_space<vmem>>, vector<400x150xbf16>
    %cst = arith.constant dense<0.000000e+00> : vector<2x150xf32>
    %2 = tpu.matmul %0, %1, %cst {dimension_numbers = #tpu.dot_dimension_numbers<[1], [0], [0], [1], [0, 0, 1, 1], [], []>} : vector<2x400xbf16>, vector<400x150xbf16>, vector<2x150xf32> -> vector<2x150xf32>
    %c0_3 = arith.constant 0 : index
    %c0_4 = arith.constant 0 : index
    %3 = vector.load %arg3[%c0_3, %c0_4] : memref<1x150xf32, #tpu.memory_space<vmem>>, vector<1x150xf32>
    %4 = vector.broadcast %3 : vector<1x150xf32> to vector<2x150xf32>
    %5 = arith.addf %2, %4 : vector<2x150xf32>
    %cst_5 = arith.constant 0.000000e+00 : f32
    %6 = vector.broadcast %cst_5 : f32 to vector<2x150xf32>
    %7 = arith.maximumf %5, %6 : vector<2x150xf32>
    %8 = arith.truncf %7 : vector<2x150xf32> to vector<2x150xbf16>
    %c0_6 = arith.constant 0 : index
    %c0_7 = arith.constant 0 : index
    %9 = vector.load %arg4[%c0_6, %c0_7] : memref<150x84xbf16, #tpu.memory_space<vmem>>, vector<150x84xbf16>
    %cst_8 = arith.constant dense<0.000000e+00> : vector<2x84xf32>
    %10 = tpu.matmul %8, %9, %cst_8 {dimension_numbers = #tpu.dot_dimension_numbers<[1], [0], [0], [1], [0, 0, 1, 1], [], []>} : vector<2x150xbf16>, vector<150x84xbf16>, vector<2x84xf32> -> vector<2x84xf32>
    %c0_9 = arith.constant 0 : index
    %c0_10 = arith.constant 0 : index
    %11 = vector.load %arg5[%c0_9, %c0_10] : memref<1x84xf32, #tpu.memory_space<vmem>>, vector<1x84xf32>
    %12 = vector.broadcast %11 : vector<1x84xf32> to vector<2x84xf32>
    %13 = arith.addf %10, %12 : vector<2x84xf32>
    %cst_11 = arith.constant 0.000000e+00 : f32
    %14 = vector.broadcast %cst_11 : f32 to vector<2x84xf32>
    %15 = arith.maximumf %13, %14 : vector<2x84xf32>
    %16 = arith.truncf %15 : vector<2x84xf32> to vector<2x84xbf16>
    %c0_12 = arith.constant 0 : index
    %c0_13 = arith.constant 0 : index
    %17 = vector.load %arg6[%c0_12, %c0_13] : memref<84x10xbf16, #tpu.memory_space<vmem>>, vector<84x10xbf16>
    %cst_14 = arith.constant dense<0.000000e+00> : vector<2x10xf32>
    %18 = tpu.matmul %16, %17, %cst_14 {dimension_numbers = #tpu.dot_dimension_numbers<[1], [0], [0], [1], [0, 0, 1, 1], [], []>} : vector<2x84xbf16>, vector<84x10xbf16>, vector<2x10xf32> -> vector<2x10xf32>
    %c0_15 = arith.constant 0 : index
    %c0_16 = arith.constant 0 : index
    %19 = vector.load %arg7[%c0_15, %c0_16] : memref<1x10xf32, #tpu.memory_space<vmem>>, vector<1x10xf32>
    %20 = vector.broadcast %19 : vector<1x10xf32> to vector<2x10xf32>
    %21 = arith.addf %18, %20 : vector<2x10xf32>
    %22 = math.tanh %21 : vector<2x10xf32>
    %c0_17 = arith.constant 0 : index
    %c0_18 = arith.constant 0 : index
    %23 = vector.load %arg8[%c0_17, %c0_18] : memref<2x10xf32, #tpu.memory_space<vmem>>, vector<2x10xf32>
    tpu.vector_store %arg8[%c0_17, %c0_18], %22 {strides = array<i32>} : memref<2x10xf32, #tpu.memory_space<vmem>>, vector<2x10xf32>,
    return
  }
  func.func @transform_0(%arg0: i32) -> (i32, i32) {
    %c0_i32 = arith.constant 0 : i32
    %c0_i32_0 = arith.constant 0 : i32
    return %arg0, %c0_i32 : i32, i32
  }
  func.func @transform_1(%arg0: i32) -> (i32, i32) {
    %c0_i32 = arith.constant 0 : i32
    %c0_i32_0 = arith.constant 0 : i32
    %c0_i32_1 = arith.constant 0 : i32
    return %c0_i32, %c0_i32_0 : i32, i32
  }
  func.func @transform_2(%arg0: i32) -> (i32, i32) {
    %c0_i32 = arith.constant 0 : i32
    %c0_i32_0 = arith.constant 0 : i32
    %c0_i32_1 = arith.constant 0 : i32
    return %c0_i32, %c0_i32_0 : i32, i32
  }
  func.func @transform_3(%arg0: i32) -> (i32, i32) {
    %c0_i32 = arith.constant 0 : i32
    %c0_i32_0 = arith.constant 0 : i32
    %c0_i32_1 = arith.constant 0 : i32
    return %c0_i32, %c0_i32_0 : i32, i32
  }
  func.func @transform_4(%arg0: i32) -> (i32, i32) {
    %c0_i32 = arith.constant 0 : i32
    %c0_i32_0 = arith.constant 0 : i32
    %c0_i32_1 = arith.constant 0 : i32
    return %c0_i32, %c0_i32_0 : i32, i32
  }
  func.func @transform_5(%arg0: i32) -> (i32, i32) {
    %c0_i32 = arith.constant 0 : i32
    %c0_i32_0 = arith.constant 0 : i32
    %c0_i32_1 = arith.constant 0 : i32
    return %c0_i32, %c0_i32_0 : i32, i32
  }
  func.func @transform_6(%arg0: i32) -> (i32, i32) {
    %c0_i32 = arith.constant 0 : i32
    %c0_i32_0 = arith.constant 0 : i32
    %c0_i32_1 = arith.constant 0 : i32
    return %c0_i32, %c0_i32_0 : i32, i32
  }
  func.func @transform_7(%arg0: i32) -> (i32, i32) {
    %c0_i32 = arith.constant 0 : i32
    %c0_i32_0 = arith.constant 0 : i32
    return %arg0, %c0_i32 : i32, i32
  }
}

</mosaic_0001>

<llo_original>
// kernel: base_forward.5
$region0: #{base_forward.5}
  #allocation0 [shape = 'u32[]', space=smem, size = 0x4, offset = 0x4, fixed_abs, tag = 'smem constant byte address 0x4 - core index']
  #allocation1 [shape = 'u32[72,128]{1,0:T(1,128)}', space=vmem, size = 0x9000, scoped, tag = 'internal scratch']
  %s0 = inlined_call_operand.vmem [shape: bf16[6,75], index: 0, kind: input, shape index: {}]
  %s1 = inlined_call_operand.vmem [shape: bf16[75,1568], index: 1, kind: input, shape index: {}]
  %s2 = inlined_call_operand.vmem [shape: f32[6,1], index: 2, kind: input, shape index: {}]
  %s3 = inlined_call_operand.vmem [shape: bf16[6,1568], index: 3, kind: output, shape index: {}]
  %s4 = sld [smem:[#allocation0]]
  $region173: #{base_forward.5} parent=0
    _
  %s6 = ssub.s32 1, %s4
  %s7 = scalar_select 0, %s6, %s4
  $region1: #{base_forward.5} parent=0
    #allocation2 [shape = 'u8[163840]{0}', space=vmem, size = 0x28000, scoped, tag = 'input window, operand 1']
    #allocation3 [shape = 'u8[16384]{0}', space=vmem, size = 0x4000, scoped, tag = 'output window, operand 0']
    loop: start=0, step=1, limit=6
    $region2: #{base_forward.5} parent=1 // loop_pre_header
      _
    $region3: #{base_forward.5} parent=1 // loop_header
      %s9 = sphi 0, %s13
      %p10 = scmp.ge.s32.totalorder %s9, 6
      %s17 = sphi 0, %s17
      %s19 = sphi 0, %s17
      %s20 = sphi 0, %s19
      %s34 = sphi 0, %s20
      %s40 = sphi 0, %s42
      %s43 = sphi 0, %s40
      %s44 = sphi 0, %s43
      %s60 = sphi 0, %s44
      %s64 = sphi 0, %s64
      %s66 = sphi 0, %s64
      %s67 = sphi 0, %s66
      %s81 = sphi 0, %s67
      %s87 = sphi 0, %s89
      %s90 = sphi 0, %s87
      %s91 = sphi 0, %s90
      %s107 = sphi 0, %s91
    $region4: #{base_forward.5} parent=1 // loop_header_branch
      %12 = sbr.rel (%p10) target = $region8
    $region5: #{base_forward.5} parent=1 // loop_body
      %s14 = ssub.s32 %s9, 1
      %s15 = ssub.s32 %s9, 2
      %s16 = sadd.s32 %s9, 1
      %s18 = sadd.s32 %s17, 1
      %p21 = scmp.eq.s32.totalorder %s9, 3
      %p22 = scmp.ne.s32.totalorder %s17, %s19
      %p23 = scmp.eq.s32.totalorder %s9, 0
      %p24 = por %p22, %p23
      %p25 = scmp.ne.s32.totalorder %s17, %s19
      %p26 = scmp.eq.s32.totalorder %s14, 3
      %p27 = por %p25, %p26
      %p28 = scmp.ne.s32.totalorder %s19, %s20
      %p29 = scmp.eq.s32.totalorder %s14, 0
      %p30 = por %p28, %p29
      %p31 = scmp.ne.s32.totalorder %s19, %s20
      %p32 = scmp.eq.s32.totalorder %s15, 3
      %p33 = por %p31, %p32
      %p35 = scmp.ne.s32.totalorder %s20, %s34
      %p36 = scmp.eq.s32.totalorder %s15, 0
      %p37 = por %p35, %p36
      %s38 = ssub.s32 %s9, %s16
      %p39 = scmp.eq.s32.totalorder %s38, 0
      %s41 = sadd.s32 %s40, 1
      %s42 = scalar_select %p39, %s40, %s41
      %p45 = pneg %p39
      %p46 = scmp.eq.s32.totalorder %s9, 3
      %p47 = por %p45, %p46
      %p48 = scmp.ne.s32.totalorder %s40, %s43
      %p49 = scmp.eq.s32.totalorder %s9, 0
      %p50 = por %p48, %p49
      %p51 = scmp.ne.s32.totalorder %s40, %s43
      %p52 = scmp.eq.s32.totalorder %s14, 3
      %p53 = por %p51, %p52
      %p54 = scmp.ne.s32.totalorder %s43, %s44
      %p55 = scmp.eq.s32.totalorder %s14, 0
      %p56 = por %p54, %p55
      %p57 = scmp.ne.s32.totalorder %s43, %s44
      %p58 = scmp.eq.s32.totalorder %s15, 3
      %p59 = por %p57, %p58
      %p61 = scmp.ne.s32.totalorder %s44, %s60
      %p62 = scmp.eq.s32.totalorder %s15, 0
      %p63 = por %p61, %p62
      %s65 = sadd.s32 %s64, 1
      %p68 = scmp.eq.s32.totalorder %s9, 3
      %p69 = scmp.ne.s32.totalorder %s64, %s66
      %p70 = scmp.eq.s32.totalorder %s9, 0
      %p71 = por %p69, %p70
      %p72 = scmp.ne.s32.totalorder %s64, %s66
      %p73 = scmp.eq.s32.totalorder %s14, 3
      %p74 = por %p72, %p73
      %p75 = scmp.ne.s32.totalorder %s66, %s67
      %p76 = scmp.eq.s32.totalorder %s14, 0
      %p77 = por %p75, %p76
      %p78 = scmp.ne.s32.totalorder %s66, %s67
      %p79 = scmp.eq.s32.totalorder %s15, 3
      %p80 = por %p78, %p79
      %p82 = scmp.ne.s32.totalorder %s67, %s81
      %p83 = scmp.eq.s32.totalorder %s15, 0
      %p84 = por %p82, %p83
      %s85 = ssub.s32 %s9, %s16
      %p86 = scmp.eq.s32.totalorder %s85, 0
      %s88 = sadd.s32 %s87, 1
      %s89 = scalar_select %p86, %s87, %s88
      %p92 = pneg %p86
      %p93 = scmp.eq.s32.totalorder %s9, 3
      %p94 = por %p92, %p93
      %p95 = scmp.ne.s32.totalorder %s87, %s90
      %p96 = scmp.eq.s32.totalorder %s9, 0
      %p97 = por %p95, %p96
      %p98 = scmp.ne.s32.totalorder %s87, %s90
      %p99 = scmp.eq.s32.totalorder %s14, 3
      %p100 = por %p98, %p99
      %p101 = scmp.ne.s32.totalorder %s90, %s91
      %p102 = scmp.eq.s32.totalorder %s14, 0
      %p103 = por %p101, %p102
      %p104 = scmp.ne.s32.totalorder %s90, %s91
      %p105 = scmp.eq.s32.totalorder %s15, 3
      %p106 = por %p104, %p105
      %p108 = scmp.ne.s32.totalorder %s91, %s107
      %p109 = scmp.eq.s32.totalorder %s15, 0
      %p110 = por %p108, %p109
      %p111 = scmp.le.s32.totalorder 1, %s9
      %p112 = scmp.lt.s32.totalorder %s9, 5
      %p113 = pnand %p111, %p112
      %p114 = pneg %p113
      // Predicated region
      $region9: #{base_forward.5} parent=5 // pred_check
        _
      $region10: #{base_forward.5} parent=5 // pred_check_branch
        %116 = sbr.rel (%p113) target = $region12
      $region11: #{base_forward.5} parent=5 // pred_region
        %s117 = ssub.s32 %s9, 1
        // Predicated region
        $region13: #{base_forward.5} parent=11 // pred_check
          %p118 = pneg %p30
        $region14: #{base_forward.5} parent=11 // pred_check_branch
          %120 = sbr.rel (%p118) target = $region16
        $region15: #{base_forward.5} parent=11 // pred_region
          _
        $region16: #{base_forward.5} parent=11 // pred_fallthru
          _
        // Predicated region
        $region17: #{base_forward.5} parent=11 // pred_check
          %p121 = pneg %p77
        $region18: #{base_forward.5} parent=11 // pred_check_branch
          %123 = sbr.rel (%p121) target = $region20
        $region19: #{base_forward.5} parent=11 // pred_region
          _
        $region20: #{base_forward.5} parent=11 // pred_fallthru
          _
      $region12: #{base_forward.5} parent=5 // pred_fallthru
        _
      %p124 = scmp.lt.s32.totalorder %s9, 4
      // Predicated region
      $region21: #{base_forward.5} parent=5 // pred_check
        %p125 = pneg %p124
      $region22: #{base_forward.5} parent=5 // pred_check_branch
        %127 = sbr.rel (%p125) target = $region24
      $region23: #{base_forward.5} parent=5 // pred_region
        // Predicated region
        $region25: #{base_forward.5} parent=23 // pred_check
          %p128 = pneg %p50
        $region26: #{base_forward.5} parent=23 // pred_check_branch
          %130 = sbr.rel (%p128) target = $region28
        $region27: #{base_forward.5} parent=23 // pred_region
          %s131 = sand.u32 %s40, 1
          %s132 = sand.u32 %s40, 1
          %s133 = smul.addr %s132, 160
          %s134 = scalar_lea.vmem [#allocation2], %s133
          %s135 = smul.u32 4, %s9
          %s136 = ssub.s32 13, %s135
          %p137 = scmp.lt.s32.totalorder %s136, 4
          %s138 = scalar_select %p137, %s136, 4
          %s139 = smul.u32 40, %s138
          %p140 = scmp.ne.s32.totalorder 0, %s139
          %s141 = smul.addr %s135, 4
          %s142 = scalar_lea.vmem %s1, %s141
          %s143 = smul.u32 %s138, 4
          // Predicated region
          $region29: #{base_forward.5} parent=27 // pred_check
            %p144 = pneg %p140
          $region30: #{base_forward.5} parent=27 // pred_check_branch
            %146 = sbr.rel (%p144) target = $region32
          $region31: #{base_forward.5} parent=27 // pred_region
            %p147 = scmp.lt.u32.totalorder %s143, 8
            %p148 = pneg %p147
            // Predicated region
            $region33: #{base_forward.5} parent=31 // pred_check
              _
            $region34: #{base_forward.5} parent=31 // pred_check_branch
              %150 = sbr.rel (%p147) target = $region36
            $region35: #{base_forward.5} parent=31 // pred_region
              %s184 = sand.u32 %s143, 7
              %p185 = scmp.eq.s32.totalorder %s184, 0
              // Predicated region
              $region48: #{base_forward.5} parent=35 // pred_check
                %p186 = pneg %p185
              $region49: #{base_forward.5} parent=35 // pred_check_branch
                %188 = sbr.rel (%p186) target = $region51
              $region50: #{base_forward.5} parent=35 // pred_region
                %s189 = sshrl.u32 %s143, 3
                %s190 = sshrl.u32 %s189, 2
                // While loop
                $region52: #{base_forward.5} parent=50 // loop_pre_header
                  _
                $region53: #{base_forward.5} parent=50 // loop_header
                  %s192 = sphi 0, %s194
                  %p193 = scmp.ge.s32.totalorder %s192, %s190
                  %s197 = sphi 0, %s282
                  %s198 = sphi %s142, %s285
                  %s199 = sphi %s134, %s286
                $region54: #{base_forward.5} parent=50 // loop_header_branch
                  %196 = sbr.rel (%p193) target = $region58
                $region55: #{base_forward.5} parent=50 // loop_body
                  %v200 = vld [vmem:[%s198] sm:$0xff]
                  %201 = vst [vmem:[%s199] sm:$0xff] %v200
                  %v202 = vld [vmem:[%s198 + $0x8] sm:$0xff]
                  %203 = vst [vmem:[%s199 + $0x8] sm:$0xff] %v202
                  %v204 = vld [vmem:[%s198 + $0x10] sm:$0xff]
                  %205 = vst [vmem:[%s199 + $0x10] sm:$0xff] %v204
                  %v206 = vld [vmem:[%s198 + $0x18] sm:$0xff]
                  %207 = vst [vmem:[%s199 + $0x18] sm:$0xff] %v206
                  %v208 = vld [vmem:[%s198 + $0x34] sm:$0xff]
                  %209 = vst [vmem:[%s199 + $0x10] sm:$0xff] %v208
                  %v210 = vld [vmem:[%s198 + $0x3c] sm:$0xff]
                  %211 = vst [vmem:[%s199 + $0x18] sm:$0xff] %v210
                  %v212 = vld [vmem:[%s198 + $0x44] sm:$0xff]
                  %213 = vst [vmem:[%s199 + $0x20] sm:$0xff] %v212
                  %v214 = vld [vmem:[%s198 + $0x4c] sm:$0xff]
                  %215 = vst [vmem:[%s199 + $0x28] sm:$0xff] %v214
                  %v216 = vld [vmem:[%s198 + $0x68] sm:$0xff]
                  %217 = vst [vmem:[%s199 + $0x20] sm:$0xff] %v216
                  %v218 = vld [vmem:[%s198 + $0x70] sm:$0xff]
                  %219 = vst [vmem:[%s199 + $0x28] sm:$0xff] %v218
                  %v220 = vld [vmem:[%s198 + $0x78] sm:$0xff]
                  %221 = vst [vmem:[%s199 + $0x30] sm:$0xff] %v220
                  %v222 = vld [vmem:[%s198 + $0x80] sm:$0xff]
                  %223 = vst [vmem:[%s199 + $0x38] sm:$0xff] %v222
                  %v224 = vld [vmem:[%s198 + $0x9c] sm:$0xff]
                  %225 = vst [vmem:[%s199 + $0x30] sm:$0xff] %v224
                  %v226 = vld [vmem:[%s198 + $0xa4] sm:$0xff]
                  %227 = vst [vmem:[%s199 + $0x38] sm:$0xff] %v226
                  %v228 = vld [vmem:[%s198 + $0xac] sm:$0xff]
                  %229 = vst [vmem:[%s199 + $0x40] sm:$0xff] %v228
                  %v230 = vld [vmem:[%s198 + $0xb4] sm:$0xff]
                  %231 = vst [vmem:[%s199 + $0x48] sm:$0xff] %v230
                  %v232 = vld [vmem:[%s198 + $0xd0] sm:$0xff]
                  %233 = vst [vmem:[%s199 + $0x40] sm:$0xff] %v232
                  %v234 = vld [vmem:[%s198 + $0xd8] sm:$0xff]
                  %235 = vst [vmem:[%s199 + $0x48] sm:$0xff] %v234
                  %v236 = vld [vmem:[%s198 + $0xe0] sm:$0xff]
                  %237 = vst [vmem:[%s199 + $0x50] sm:$0xff] %v236
                  %v238 = vld [vmem:[%s198 + $0xe8] sm:$0xff]
                  %239 = vst [vmem:[%s199 + $0x58] sm:$0xff] %v238
                  %v240 = vld [vmem:[%s198 + $0x104] sm:$0xff]
                  %241 = vst [vmem:[%s199 + $0x50] sm:$0xff] %v240
                  %v242 = vld [vmem:[%s198 + $0x10c] sm:$0xff]
                  %243 = vst [vmem:[%s199 + $0x58] sm:$0xff] %v242
                  %v244 = vld [vmem:[%s198 + $0x114] sm:$0xff]
                  %245 = vst [vmem:[%s199 + $0x60] sm:$0xff] %v244
                  %v246 = vld [vmem:[%s198 + $0x11c] sm:$0xff]
                  %247 = vst [vmem:[%s199 + $0x68] sm:$0xff] %v246
                  %v248 = vld [vmem:[%s198 + $0x138] sm:$0xff]
                  %249 = vst [vmem:[%s199 + $0x60] sm:$0xff] %v248
                  %v250 = vld [vmem:[%s198 + $0x140] sm:$0xff]
                  %251 = vst [vmem:[%s199 + $0x68] sm:$0xff] %v250
                  %v252 = vld [vmem:[%s198 + $0x148] sm:$0xff]
                  %253 = vst [vmem:[%s199 + $0x70] sm:$0xff] %v252
                  %v254 = vld [vmem:[%s198 + $0x150] sm:$0xff]
                  %255 = vst [vmem:[%s199 + $0x78] sm:$0xff] %v254
                  %v256 = vld [vmem:[%s198 + $0x16c] sm:$0xff]
                  %257 = vst [vmem:[%s199 + $0x70] sm:$0xff] %v256
                  %v258 = vld [vmem:[%s198 + $0x174] sm:$0xff]
                  %259 = vst [vmem:[%s199 + $0x78] sm:$0xff] %v258
                  %v260 = vld [vmem:[%s198 + $0x17c] sm:$0xff]
                  %261 = vst [vmem:[%s199 + $0x80] sm:$0xff] %v260
                  %v262 = vld [vmem:[%s198 + $0x184] sm:$0xff]
                  %263 = vst [vmem:[%s199 + $0x88] sm:$0xff] %v262
                  %v264 = vld [vmem:[%s198 + $0x1a0] sm:$0xff]
                  %265 = vst [vmem:[%s199 + $0x80] sm:$0xff] %v264
                  %v266 = vld [vmem:[%s198 + $0x1a8] sm:$0xff]
                  %267 = vst [vmem:[%s199 + $0x88] sm:$0xff] %v266
                  %v268 = vld [vmem:[%s198 + $0x1b0] sm:$0xff]
                  %269 = vst [vmem:[%s199 + $0x90] sm:$0xff] %v268
                  %v270 = vld [vmem:[%s198 + $0x1b8] sm:$0xff]
                  %271 = vst [vmem:[%s199 + $0x98] sm:$0xff] %v270
                  %v272 = vld [vmem:[%s198 + $0x1d4] sm:$0xff]
                  %273 = vst [vmem:[%s199 + $0x90] sm:$0xff] %v272
                  %v274 = vld [vmem:[%s198 + $0x1dc] sm:$0xff]
                  %275 = vst [vmem:[%s199 + $0x98] sm:$0xff] %v274
                  %v276 = vld [vmem:[%s198 + $0x1e4] sm:$0xff]
                  %277 = vst [vmem:[%s199 + $0xa0] sm:$0xff] %v276
                  %v278 = vld [vmem:[%s198 + $0x1ec] sm:$0xff]
                  %279 = vst [vmem:[%s199 + $0xa8] sm:$0xff] %v278
                  %s280 = sadd.s32 1, %s197
                  %p281 = scmp.ge.s32.totalorder %s280, %s190
                  %s282 = scalar_select %p281, 0, %s280
                  %s283 = smul.u32 %s282, 32
                  %s284 = smul.u32 %s282, 32
                  %s285 = scalar_lea.vmem %s142, %s283
                  %s286 = scalar_lea.vmem %s134, %s284 [#allocation2]
                $region56: #{base_forward.5} parent=50 // loop_footer
                  %s194 = sadd.s32 %s192, 1
                $region57: #{base_forward.5} parent=50 // loop_footer_branch
                  %191 = sbr.rel target = $region53
                $region58: #{base_forward.5} parent=50 // loop_exit
                  _
                %s287 = sshrl.u32 %s189, 2
                %s288 = sand.u32 %s189, 3
                %s289 = smul.u32 %s287, 4
                %s290 = smul.u32 8, %s289
                %s291 = scalar_lea.vmem %s142, %s290
                %s292 = smul.u32 8, %s289
                %s293 = scalar_lea.vmem %s134, %s292 [#allocation2]
                // While loop
                $region59: #{base_forward.5} parent=50 // loop_pre_header
                  _
                $region60: #{base_forward.5} parent=50 // loop_header
                  %s295 = sphi 0, %s297
                  %p296 = scmp.ge.s32.totalorder %s295, %s288
                  %s300 = sphi 0, %s325
                  %s301 = sphi %s291, %s328
                  %s302 = sphi %s293, %s329
                $region61: #{base_forward.5} parent=50 // loop_header_branch
                  %299 = sbr.rel (%p296) target = $region65
                $region62: #{base_forward.5} parent=50 // loop_body
                  %v303 = vld [vmem:[%s301] sm:$0xff]
                  %304 = vst [vmem:[%s302] sm:$0xff] %v303
                  %v305 = vld [vmem:[%s301 + $0x34] sm:$0xff]
                  %306 = vst [vmem:[%s302 + $0x10] sm:$0xff] %v305
                  %v307 = vld [vmem:[%s301 + $0x68] sm:$0xff]
                  %308 = vst [vmem:[%s302 + $0x20] sm:$0xff] %v307
                  %v309 = vld [vmem:[%s301 + $0x9c] sm:$0xff]
                  %310 = vst [vmem:[%s302 + $0x30] sm:$0xff] %v309
                  %v311 = vld [vmem:[%s301 + $0xd0] sm:$0xff]
                  %312 = vst [vmem:[%s302 + $0x40] sm:$0xff] %v311
                  %v313 = vld [vmem:[%s301 + $0x104] sm:$0xff]
                  %314 = vst [vmem:[%s302 + $0x50] sm:$0xff] %v313
                  %v315 = vld [vmem:[%s301 + $0x138] sm:$0xff]
                  %316 = vst [vmem:[%s302 + $0x60] sm:$0xff] %v315
                  %v317 = vld [vmem:[%s301 + $0x16c] sm:$0xff]
                  %318 = vst [vmem:[%s302 + $0x70] sm:$0xff] %v317
                  %v319 = vld [vmem:[%s301 + $0x1a0] sm:$0xff]
                  %320 = vst [vmem:[%s302 + $0x80] sm:$0xff] %v319
                  %v321 = vld [vmem:[%s301 + $0x1d4] sm:$0xff]
                  %322 = vst [vmem:[%s302 + $0x90] sm:$0xff] %v321
                  %s323 = sadd.s32 1, %s300
                  %p324 = scmp.ge.s32.totalorder %s323, %s288
                  %s325 = scalar_select %p324, 0, %s323
                  %s326 = smul.u32 %s325, 8
                  %s327 = smul.u32 %s325, 8
                  %s328 = scalar_lea.vmem %s291, %s326
                  %s329 = scalar_lea.vmem %s293, %s327 [#allocation2]
                $region63: #{base_forward.5} parent=50 // loop_footer
                  %s297 = sadd.s32 %s295, 1
                $region64: #{base_forward.5} parent=50 // loop_footer_branch
                  %294 = sbr.rel target = $region60
                $region65: #{base_forward.5} parent=50 // loop_exit
                  _
              $region51: #{base_forward.5} parent=35 // pred_fallthru
                _
              %p330 = pneg %p185
              // Predicated region
              $region66: #{base_forward.5} parent=35 // pred_check
                _
              $region67: #{base_forward.5} parent=35 // pred_check_branch
                %332 = sbr.rel (%p185) target = $region69
              $region68: #{base_forward.5} parent=35 // pred_region
                %s333 = sand.u32 %s143, 7
                %s334 = ssub.s32 %s143, %s333
                %s335 = scalar_lea.vmem %s142, %s334
                %s336 = ssub.s32 %s143, %s333
                %s337 = scalar_lea.vmem %s134, %s336 [#allocation2]
                %s338 = sshrl.u32 %s143, 3
                %s339 = sshrl.u32 %s338, 2
                // While loop
                $region70: #{base_forward.5} parent=68 // loop_pre_header
                  _
                $region71: #{base_forward.5} parent=68 // loop_header
                  %s341 = sphi 0, %s343
                  %p342 = scmp.ge.s32.totalorder %s341, %s339
                  %s346 = sphi 0, %s431
                  %s347 = sphi %s142, %s434
                  %s348 = sphi %s134, %s435
                $region72: #{base_forward.5} parent=68 // loop_header_branch
                  %345 = sbr.rel (%p342) target = $region76
                $region73: #{base_forward.5} parent=68 // loop_body
                  %v349 = vld [vmem:[%s347] sm:$0xff]
                  %350 = vst [vmem:[%s348] sm:$0xff] %v349
                  %v351 = vld [vmem:[%s347 + $0x8] sm:$0xff]
                  %352 = vst [vmem:[%s348 + $0x8] sm:$0xff] %v351
                  %v353 = vld [vmem:[%s347 + $0x10] sm:$0xff]
                  %354 = vst [vmem:[%s348 + $0x10] sm:$0xff] %v353
                  %v355 = vld [vmem:[%s347 + $0x18] sm:$0xff]
                  %356 = vst [vmem:[%s348 + $0x18] sm:$0xff] %v355
                  %v357 = vld [vmem:[%s347 + $0x34] sm:$0xff]
                  %358 = vst [vmem:[%s348 + $0x10] sm:$0xff] %v357
                  %v359 = vld [vmem:[%s347 + $0x3c] sm:$0xff]
                  %360 = vst [vmem:[%s348 + $0x18] sm:$0xff] %v359
                  %v361 = vld [vmem:[%s347 + $0x44] sm:$0xff]
                  %362 = vst [vmem:[%s348 + $0x20] sm:$0xff] %v361
                  %v363 = vld [vmem:[%s347 + $0x4c] sm:$0xff]
                  %364 = vst [vmem:[%s348 + $0x28] sm:$0xff] %v363
                  %v365 = vld [vmem:[%s347 + $0x68] sm:$0xff]
                  %366 = vst [vmem:[%s348 + $0x20] sm:$0xff] %v365
                  %v367 = vld [vmem:[%s347 + $0x70] sm:$0xff]
                  %368 = vst [vmem:[%s348 + $0x28] sm:$0xff] %v367
                  %v369 = vld [vmem:[%s347 + $0x78] sm:$0xff]
                  %370 = vst [vmem:[%s348 + $0x30] sm:$0xff] %v369
                  %v371 = vld [vmem:[%s347 + $0x80] sm:$0xff]
                  %372 = vst [vmem:[%s348 + $0x38] sm:$0xff] %v371
                  %v373 = vld [vmem:[%s347 + $0x9c] sm:$0xff]
                  %374 = vst [vmem:[%s348 + $0x30] sm:$0xff] %v373
                  %v375 = vld [vmem:[%s347 + $0xa4] sm:$0xff]
                  %376 = vst [vmem:[%s348 + $0x38] sm:$0xff] %v375
                  %v377 = vld [vmem:[%s347 + $0xac] sm:$0xff]
                  %378 = vst [vmem:[%s348 + $0x40] sm:$0xff] %v377
                  %v379 = vld [vmem:[%s347 + $0xb4] sm:$0xff]
                  %380 = vst [vmem:[%s348 + $0x48] sm:$0xff] %v379
                  %v381 = vld [vmem:[%s347 + $0xd0] sm:$0xff]
                  %382 = vst [vmem:[%s348 + $0x40] sm:$0xff] %v381
                  %v383 = vld [vmem:[%s347 + $0xd8] sm:$0xff]
                  %384 = vst [vmem:[%s348 + $0x48] sm:$0xff] %v383
                  %v385 = vld [vmem:[%s347 + $0xe0] sm:$0xff]
                  %386 = vst [vmem:[%s348 + $0x50] sm:$0xff] %v385
                  %v387 = vld [vmem:[%s347 + $0xe8] sm:$0xff]
                  %388 = vst [vmem:[%s348 + $0x58] sm:$0xff] %v387
                  %v389 = vld [vmem:[%s347 + $0x104] sm:$0xff]
                  %390 = vst [vmem:[%s348 + $0x50] sm:$0xff] %v389
                  %v391 = vld [vmem:[%s347 + $0x10c] sm:$0xff]
                  %392 = vst [vmem:[%s348 + $0x58] sm:$0xff] %v391
                  %v393 = vld [vmem:[%s347 + $0x114] sm:$0xff]
                  %394 = vst [vmem:[%s348 + $0x60] sm:$0xff] %v393
                  %v395 = vld [vmem:[%s347 + $0x11c] sm:$0xff]
                  %396 = vst [vmem:[%s348 + $0x68] sm:$0xff] %v395
                  %v397 = vld [vmem:[%s347 + $0x138] sm:$0xff]
                  %398 = vst [vmem:[%s348 + $0x60] sm:$0xff] %v397
                  %v399 = vld [vmem:[%s347 + $0x140] sm:$0xff]
                  %400 = vst [vmem:[%s348 + $0x68] sm:$0xff] %v399
                  %v401 = vld [vmem:[%s347 + $0x148] sm:$0xff]
                  %402 = vst [vmem:[%s348 + $0x70] sm:$0xff] %v401
                  %v403 = vld [vmem:[%s347 + $0x150] sm:$0xff]
                  %404 = vst [vmem:[%s348 + $0x78] sm:$0xff] %v403
                  %v405 = vld [vmem:[%s347 + $0x16c] sm:$0xff]
                  %406 = vst [vmem:[%s348 + $0x70] sm:$0xff] %v405
                  %v407 = vld [vmem:[%s347 + $0x174] sm:$0xff]
                  %408 = vst [vmem:[%s348 + $0x78] sm:$0xff] %v407
                  %v409 = vld [vmem:[%s347 + $0x17c] sm:$0xff]
                  %410 = vst [vmem:[%s348 + $0x80] sm:$0xff] %v409
                  %v411 = vld [vmem:[%s347 + $0x184] sm:$0xff]
                  %412 = vst [vmem:[%s348 + $0x88] sm:$0xff] %v411
                  %v413 = vld [vmem:[%s347 + $0x1a0] sm:$0xff]
                  %414 = vst [vmem:[%s348 + $0x80] sm:$0xff] %v413
                  %v415 = vld [vmem:[%s347 + $0x1a8] sm:$0xff]
                  %416 = vst [vmem:[%s348 + $0x88] sm:$0xff] %v415
                  %v417 = vld [vmem:[%s347 + $0x1b0] sm:$0xff]
                  %418 = vst [vmem:[%s348 + $0x90] sm:$0xff] %v417
                  %v419 = vld [vmem:[%s347 + $0x1b8] sm:$0xff]
                  %420 = vst [vmem:[%s348 + $0x98] sm:$0xff] %v419
                  %v421 = vld [vmem:[%s347 + $0x1d4] sm:$0xff]
                  %422 = vst [vmem:[%s348 + $0x90] sm:$0xff] %v421
                  %v423 = vld [vmem:[%s347 + $0x1dc] sm:$0xff]
                  %424 = vst [vmem:[%s348 + $0x98] sm:$0xff] %v423
                  %v425 = vld [vmem:[%s347 + $0x1e4] sm:$0xff]
                  %426 = vst [vmem:[%s348 + $0xa0] sm:$0xff] %v425
                  %v427 = vld [vmem:[%s347 + $0x1ec] sm:$0xff]
                  %428 = vst [vmem:[%s348 + $0xa8] sm:$0xff] %v427
                  %s429 = sadd.s32 1, %s346
                  %p430 = scmp.ge.s32.totalorder %s429, %s339
                  %s431 = scalar_select %p430, 0, %s429
                  %s432 = smul.u32 %s431, 32
                  %s433 = smul.u32 %s431, 32
                  %s434 = scalar_lea.vmem %s142, %s432
                  %s435 = scalar_lea.vmem %s134, %s433 [#allocation2]
                $region74: #{base_forward.5} parent=68 // loop_footer
                  %s343 = sadd.s32 %s341, 1
                $region75: #{base_forward.5} parent=68 // loop_footer_branch
                  %340 = sbr.rel target = $region71
                $region76: #{base_forward.5} parent=68 // loop_exit
                  _
                %s436 = sshrl.u32 %s338, 2
                %s437 = sand.u32 %s338, 3
                %s438 = smul.u32 %s436, 4
                %s439 = smul.u32 8, %s438
                %s440 = scalar_lea.vmem %s142, %s439
                %s441 = smul.u32 8, %s438
                %s442 = scalar_lea.vmem %s134, %s441 [#allocation2]
                // While loop
                $region77: #{base_forward.5} parent=68 // loop_pre_header
                  _
                $region78: #{base_forward.5} parent=68 // loop_header
                  %s444 = sphi 0, %s446
                  %p445 = scmp.ge.s32.totalorder %s444, %s437
                  %s449 = sphi 0, %s474
                  %s450 = sphi %s440, %s477
                  %s451 = sphi %s442, %s478
                $region79: #{base_forward.5} parent=68 // loop_header_branch
                  %448 = sbr.rel (%p445) target = $region83
                $region80: #{base_forward.5} parent=68 // loop_body
                  %v452 = vld [vmem:[%s450] sm:$0xff]
                  %453 = vst [vmem:[%s451] sm:$0xff] %v452
                  %v454 = vld [vmem:[%s450 + $0x34] sm:$0xff]
                  %455 = vst [vmem:[%s451 + $0x10] sm:$0xff] %v454
                  %v456 = vld [vmem:[%s450 + $0x68] sm:$0xff]
                  %457 = vst [vmem:[%s451 + $0x20] sm:$0xff] %v456
                  %v458 = vld [vmem:[%s450 + $0x9c] sm:$0xff]
                  %459 = vst [vmem:[%s451 + $0x30] sm:$0xff] %v458
                  %v460 = vld [vmem:[%s450 + $0xd0] sm:$0xff]
                  %461 = vst [vmem:[%s451 + $0x40] sm:$0xff] %v460
                  %v462 = vld [vmem:[%s450 + $0x104] sm:$0xff]
                  %463 = vst [vmem:[%s451 + $0x50] sm:$0xff] %v462
                  %v464 = vld [vmem:[%s450 + $0x138] sm:$0xff]
                  %465 = vst [vmem:[%s451 + $0x60] sm:$0xff] %v464
                  %v466 = vld [vmem:[%s450 + $0x16c] sm:$0xff]
                  %467 = vst [vmem:[%s451 + $0x70] sm:$0xff] %v466
                  %v468 = vld [vmem:[%s450 + $0x1a0] sm:$0xff]
                  %469 = vst [vmem:[%s451 + $0x80] sm:$0xff] %v468
                  %v470 = vld [vmem:[%s450 + $0x1d4] sm:$0xff]
                  %471 = vst [vmem:[%s451 + $0x90] sm:$0xff] %v470
                  %s472 = sadd.s32 1, %s449
                  %p473 = scmp.ge.s32.totalorder %s472, %s437
                  %s474 = scalar_select %p473, 0, %s472
                  %s475 = smul.u32 %s474, 8
                  %s476 = smul.u32 %s474, 8
                  %s477 = scalar_lea.vmem %s440, %s475
                  %s478 = scalar_lea.vmem %s442, %s476 [#allocation2]
                $region81: #{base_forward.5} parent=68 // loop_footer
                  %s446 = sadd.s32 %s444, 1
                $region82: #{base_forward.5} parent=68 // loop_footer_branch
                  %443 = sbr.rel target = $region78
                $region83: #{base_forward.5} parent=68 // loop_exit
                  _
                %s479 = sshll.u32 1, %s333
                %s480 = ssub.s32 %s479, 1
                loop: start=0, step=1, limit=1
                $region84: #{base_forward.5} parent=68 // loop_pre_header
                  _
                $region85: #{base_forward.5} parent=68 // loop_header
                  %s482 = sphi 0, %s486
                  %p483 = scmp.ge.s32.totalorder %s482, 1
                  %s487 = sphi %s335, %s335
                  %s488 = sphi %s337, %s337
                $region86: #{base_forward.5} parent=68 // loop_header_branch
                  %485 = sbr.rel (%p483) target = $region90
                $region87: #{base_forward.5} parent=68 // loop_body
                  %v489 = vld [vmem:[%s487] sm:%s480]
                  %490 = vst [vmem:[%s488] sm:%s480] %v489
                  %v491 = vld [vmem:[%s487 + $0x34] sm:%s480]
                  %492 = vst [vmem:[%s488 + $0x10] sm:%s480] %v491
                  %v493 = vld [vmem:[%s487 + $0x68] sm:%s480]
                  %494 = vst [vmem:[%s488 + $0x20] sm:%s480] %v493
                  %v495 = vld [vmem:[%s487 + $0x9c] sm:%s480]
                  %496 = vst [vmem:[%s488 + $0x30] sm:%s480] %v495
                  %v497 = vld [vmem:[%s487 + $0xd0] sm:%s480]
                  %498 = vst [vmem:[%s488 + $0x40] sm:%s480] %v497
                  %v499 = vld [vmem:[%s487 + $0x104] sm:%s480]
                  %500 = vst [vmem:[%s488 + $0x50] sm:%s480] %v499
                  %v501 = vld [vmem:[%s487 + $0x138] sm:%s480]
                  %502 = vst [vmem:[%s488 + $0x60] sm:%s480] %v501
                  %v503 = vld [vmem:[%s487 + $0x16c] sm:%s480]
                  %504 = vst [vmem:[%s488 + $0x70] sm:%s480] %v503
                  %v505 = vld [vmem:[%s487 + $0x1a0] sm:%s480]
                  %506 = vst [vmem:[%s488 + $0x80] sm:%s480] %v505
                  %v507 = vld [vmem:[%s487 + $0x1d4] sm:%s480]
                  %508 = vst [vmem:[%s488 + $0x90] sm:%s480] %v507
                $region88: #{base_forward.5} parent=68 // loop_footer
                  %s486 = sadd.s32 1, %s482
                $region89: #{base_forward.5} parent=68 // loop_footer_branch
                  %481 = sbr.rel target = $region85
                $region90: #{base_forward.5} parent=68 // loop_exit
                  _
              $region69: #{base_forward.5} parent=35 // pred_fallthru
                _
            $region36: #{base_forward.5} parent=31 // pred_fallthru
              _
            // Predicated region
            $region37: #{base_forward.5} parent=31 // pred_check
              %p151 = pneg %p147
            $region38: #{base_forward.5} parent=31 // pred_check_branch
              %153 = sbr.rel (%p151) target = $region40
            $region39: #{base_forward.5} parent=31 // pred_region
              %s154 = sshll.u32 1, %s143
              %s155 = ssub.s32 %s154, 1
              loop: start=0, step=1, limit=1
              $region41: #{base_forward.5} parent=39 // loop_pre_header
                _
              $region42: #{base_forward.5} parent=39 // loop_header
                %s157 = sphi 0, %s161
                %p158 = scmp.ge.s32.totalorder %s157, 1
                %s162 = sphi %s142, %s142
                %s163 = sphi %s134, %s134
              $region43: #{base_forward.5} parent=39 // loop_header_branch
                %160 = sbr.rel (%p158) target = $region47
              $region44: #{base_forward.5} parent=39 // loop_body
                %v164 = vld [vmem:[%s162] sm:%s155]
                %165 = vst [vmem:[%s163] sm:%s155] %v164
                %v166 = vld [vmem:[%s162 + $0x34] sm:%s155]
                %167 = vst [vmem:[%s163 + $0x10] sm:%s155] %v166
                %v168 = vld [vmem:[%s162 + $0x68] sm:%s155]
                %169 = vst [vmem:[%s163 + $0x20] sm:%s155] %v168
                %v170 = vld [vmem:[%s162 + $0x9c] sm:%s155]
                %171 = vst [vmem:[%s163 + $0x30] sm:%s155] %v170
                %v172 = vld [vmem:[%s162 + $0xd0] sm:%s155]
                %173 = vst [vmem:[%s163 + $0x40] sm:%s155] %v172
                %v174 = vld [vmem:[%s162 + $0x104] sm:%s155]
                %175 = vst [vmem:[%s163 + $0x50] sm:%s155] %v174
                %v176 = vld [vmem:[%s162 + $0x138] sm:%s155]
                %177 = vst [vmem:[%s163 + $0x60] sm:%s155] %v176
                %v178 = vld [vmem:[%s162 + $0x16c] sm:%s155]
                %179 = vst [vmem:[%s163 + $0x70] sm:%s155] %v178
                %v180 = vld [vmem:[%s162 + $0x1a0] sm:%s155]
                %181 = vst [vmem:[%s163 + $0x80] sm:%s155] %v180
                %v182 = vld [vmem:[%s162 + $0x1d4] sm:%s155]
                %183 = vst [vmem:[%s163 + $0x90] sm:%s155] %v182
              $region45: #{base_forward.5} parent=39 // loop_footer
                %s161 = sadd.s32 1, %s157
              $region46: #{base_forward.5} parent=39 // loop_footer_branch
                %156 = sbr.rel target = $region42
              $region47: #{base_forward.5} parent=39 // loop_exit
                _
            $region40: #{base_forward.5} parent=31 // pred_fallthru
              _
          $region32: #{base_forward.5} parent=27 // pred_fallthru
            _
          %509 = vnop
        $region28: #{base_forward.5} parent=23 // pred_fallthru
          _
      $region24: #{base_forward.5} parent=5 // pred_fallthru
        _
      %p510 = scmp.le.s32.totalorder 1, %s9
      %p511 = scmp.lt.s32.totalorder %s9, 5
      %p512 = pnand %p510, %p511
      %p513 = pneg %p512
      // Predicated region
      $region91: #{base_forward.5} parent=5 // pred_check
        _
      $region92: #{base_forward.5} parent=5 // pred_check_branch
        %515 = sbr.rel (%p512) target = $region94
      $region93: #{base_forward.5} parent=5 // pred_region
        %s516 = ssub.s32 %s9, 1
        %s517 = sand.u32 %s43, 1
        %s518 = sand.u32 %s43, 1
        %s519 = smul.addr %s518, 160
        %s520 = scalar_lea.vmem [#allocation2], %s519
        // Predicated region
        $region95: #{base_forward.5} parent=93 // pred_check
          %p521 = pneg %p56
        $region96: #{base_forward.5} parent=93 // pred_check_branch
          %523 = sbr.rel (%p521) target = $region98
        $region97: #{base_forward.5} parent=93 // pred_region
          _
        $region98: #{base_forward.5} parent=93 // pred_fallthru
          _
        %p524 = pneg %p30
        %p525 = pneg %p27
        %s526 = sand.u32 %s43, 1
        %s527 = sand.u32 %s43, 1
        %s528 = smul.addr %s527, 160
        %s529 = scalar_lea.vmem [#allocation2], %s528
        %p530 = pneg %p56
        %p531 = pneg %p53
        %p532 = pneg %p77
        %p533 = pneg %p74
        %p534 = pneg %p103
        %p535 = pneg %p100
        %s536 = sand.u32 %s90, 1
        %s537 = sand.u32 %s90, 1
        %s538 = smul.addr %s537, 16
        %s539 = scalar_lea.vmem [#allocation3], %s538
        %s540 = smul.u32 4, %s14
        %s541 = ssub.s32 13, %s540
        %p542 = scmp.lt.s32.totalorder %s541, 4
        %s543 = scalar_select %p542, %s541, 4
        %s544 = smul.u32 40, %s543
        %s545 = smul.u32 4, %s14
        %s546 = ssub.s32 13, %s545
        %p547 = scmp.lt.s32.totalorder %s546, 4
        %s548 = scalar_select %p547, %s546, 4
        %s549 = smul.u32 4, %s548
        %v551 = vld [vmem:[%s0] sm:$0x7]
        %v552 = vld [vmem:[%s520] sm:$0xff]
        %v553 = vld [vmem:[%s520 + $0x8] sm:$0xff]
        %v554 = vld [vmem:[%s520 + $0x10] sm:$0xff]
        %v555 = vld [vmem:[%s520 + $0x18] sm:$0xff]
        %v556 = vld [vmem:[%s520 + $0x20] sm:$0xff]
        %v557 = vld [vmem:[%s520 + $0x28] sm:$0xff]
        %v558 = vld [vmem:[%s520 + $0x30] sm:$0xff]
        %v559 = vld [vmem:[%s520 + $0x38] sm:$0xff]
        %v560 = vld [vmem:[%s520 + $0x40] sm:$0xff]
        %v561 = vld [vmem:[%s520 + $0x48] sm:$0xff]
        %v562 = vld [vmem:[%s520 + $0x50] sm:$0xff]
        %v563 = vld [vmem:[%s520 + $0x58] sm:$0xff]
        %v564 = vld [vmem:[%s520 + $0x60] sm:$0xff]
        %v565 = vld [vmem:[%s520 + $0x68] sm:$0xff]
        %v566 = vld [vmem:[%s520 + $0x70] sm:$0xff]
        %v567 = vld [vmem:[%s520 + $0x78] sm:$0xff]
        %v568 = vld [vmem:[%s520 + $0x80] sm:$0xff]
        %v569 = vld [vmem:[%s520 + $0x88] sm:$0xff]
        %v570 = vld [vmem:[%s520 + $0x90] sm:$0x33]
        %v571 = vld [vmem:[%s520 + $0x98] sm:$0x33]
        %v572 = vld [vmem:[%s2] sm:$0x3f]
        %574 = vset.pattern.permute.xlu0 0
        %575 = vperm.xlu0 %574, %v572
        %v576 = vpop.permute.xlu0 %575
        %v598 = vunpack.c.l.b16 %v552
        %v599 = vunpack.c.h.b16 %v552
        %v600 = vunpack.c.l.b16 %v553
        %v601 = vunpack.c.h.b16 %v553
        %v602 = vunpack.c.l.b16 %v554
        %v603 = vunpack.c.h.b16 %v554
        %v604 = vunpack.c.l.b16 %v555
        %v605 = vunpack.c.h.b16 %v555
        %v606 = vunpack.c.l.b16 %v556
        %v607 = vunpack.c.h.b16 %v556
        %v608 = vunpack.c.l.b16 %v557
        %v609 = vunpack.c.h.b16 %v557
        %v610 = vunpack.c.l.b16 %v558
        %v611 = vunpack.c.h.b16 %v558
        %v612 = vunpack.c.l.b16 %v559
        %v613 = vunpack.c.h.b16 %v559
        %v614 = vunpack.c.l.b16 %v560
        %v615 = vunpack.c.h.b16 %v560
        %v616 = vunpack.c.l.b16 %v561
        %v617 = vunpack.c.h.b16 %v561
        %v618 = vunpack.c.l.b16 %v562
        %v619 = vunpack.c.h.b16 %v562
        %v620 = vunpack.c.l.b16 %v563
        %v621 = vunpack.c.h.b16 %v563
        %v622 = vunpack.c.l.b16 %v564
        %v623 = vunpack.c.h.b16 %v564
        %v624 = vunpack.c.l.b16 %v565
        %v625 = vunpack.c.h.b16 %v565
        %v626 = vunpack.c.l.b16 %v566
        %v627 = vunpack.c.h.b16 %v566
        %v628 = vunpack.c.l.b16 %v567
        %v629 = vunpack.c.h.b16 %v567
        %v630 = vunpack.c.l.b16 %v568
        %v631 = vunpack.c.h.b16 %v568
        %v632 = vunpack.c.l.b16 %v569
        %v633 = vunpack.c.h.b16 %v569
        %v634 = vunpack.c.l.b16 %v570
        %v635 = vunpack.c.h.b16 %v570
        %v636 = vunpack.c.l.b16 %v571
        %v637 = vunpack.c.h.b16 %v571
        %v638 = vpack.c.b16 %v602, %v598
        %v639 = vpack.c.b16 %v603, %v599
        %v640 = vpack.c.b16 %v604, %v600
        %v641 = vpack.c.b16 %v605, %v601
        %v642 = vpack.c.b16 %v610, %v606
        %v643 = vpack.c.b16 %v611, %v607
        %v644 = vpack.c.b16 %v612, %v608
        %v645 = vpack.c.b16 %v613, %v609
        %v646 = vpack.c.b16 %v618, %v614
        %v647 = vpack.c.b16 %v619, %v615
        %v648 = vpack.c.b16 %v620, %v616
        %v649 = vpack.c.b16 %v621, %v617
        %v650 = vpack.c.b16 %v626, %v622
        %v651 = vpack.c.b16 %v627, %v623
        %v652 = vpack.c.b16 %v628, %v624
        %v653 = vpack.c.b16 %v629, %v625
        %v654 = vpack.c.b16 %v634, %v630
        %v655 = vpack.c.b16 %v635, %v631
        %v656 = vpack.c.b16 %v636, %v632
        %v657 = vpack.c.b16 %v637, %v633
        %vm674 = vcmask 613376
        %v676 = vsel %vm674, %v551, 0
        %vm678 = vcmask 1044480
        %vm679 = vcmask 1045504
        %v680 = vsel %vm678, 4294967295, 65535
        %v681 = vsel %vm679, %v680, 0
        %v683 = vand.u32 %v654, %v681
        %v686 = vand.u32 %v655, %v681
        %v689 = vand.u32 %v656, %v681
        %v692 = vand.u32 %v657, %v681
        %694 = vmatpush.bf16.msra.mxu0 0
        %695 = vmatpush.bf16.msra.mxu0 0
        %696 = vmatpush.bf16.msra.mxu0 0
        %697 = vmatpush.bf16.msra.mxu0 %v683
        %698 = vmatpush.bf16.msra.mxu0 %v650
        %699 = vmatpush.bf16.msra.mxu0 %v646
        %700 = vmatpush.bf16.msra.mxu0 %v642
        %701 = vmatpush.bf16.msra.mxu0 %v638
        %702 = vmatmul.bf16.gmra.mxu0 %v676
        %v703 = vpop.f32.mrf.mxu0
        %v704 = vadd.f32 %v576, %v703
        %v705 = vpop.f32.mrf.mxu0
        %706 = vdwg.mxu0
        %707 = vmatpush.bf16.msra.mxu0 0
        %708 = vmatpush.bf16.msra.mxu0 0
        %709 = vmatpush.bf16.msra.mxu0 0
        %710 = vmatpush.bf16.msra.mxu0 %v686
        %711 = vmatpush.bf16.msra.mxu0 %v651
        %712 = vmatpush.bf16.msra.mxu0 %v647
        %713 = vmatpush.bf16.msra.mxu0 %v643
        %714 = vmatpush.bf16.msra.mxu0 %v639
        %715 = vmatmul.bf16.gmra.mxu0 %v676
        %v716 = vpop.f32.mrf.mxu0
        %v717 = vadd.f32 %v576, %v716
        %v718 = vpop.f32.mrf.mxu0
        %719 = vdwg.mxu0
        %720 = vmatpush.bf16.msra.mxu0 0
        %721 = vmatpush.bf16.msra.mxu0 0
        %722 = vmatpush.bf16.msra.mxu0 0
        %723 = vmatpush.bf16.msra.mxu0 %v689
        %724 = vmatpush.bf16.msra.mxu0 %v652
        %725 = vmatpush.bf16.msra.mxu0 %v648
        %726 = vmatpush.bf16.msra.mxu0 %v644
        %727 = vmatpush.bf16.msra.mxu0 %v640
        %728 = vmatmul.bf16.gmra.mxu0 %v676
        %v729 = vpop.f32.mrf.mxu0
        %v730 = vadd.f32 %v576, %v729
        %v731 = vpop.f32.mrf.mxu0
        %732 = vdwg.mxu0
        %733 = vmatpush.bf16.msra.mxu0 0
        %734 = vmatpush.bf16.msra.mxu0 0
        %735 = vmatpush.bf16.msra.mxu0 0
        %736 = vmatpush.bf16.msra.mxu0 %v692
        %737 = vmatpush.bf16.msra.mxu0 %v653
        %738 = vmatpush.bf16.msra.mxu0 %v649
        %739 = vmatpush.bf16.msra.mxu0 %v645
        %740 = vmatpush.bf16.msra.mxu0 %v641
        %741 = vmatmul.bf16.gmra.mxu0 %v676
        %v742 = vpop.f32.mrf.mxu0
        %v743 = vadd.f32 %v576, %v742
        %v744 = vpop.f32.mrf.mxu0
        %745 = vdwg.mxu0
        %v746 = vmax.f32 %v704, 0.0
        %v747 = vmax.f32 %v717, 0.0
        %v748 = vmax.f32 %v730, 0.0
        %v749 = vmax.f32 %v743, 0.0
        %v750 = vpack.c.bf16 %v747, %v746
        %v751 = vpack.c.bf16 %v749, %v748
        %752 = vst [vmem:[%s539] sm:$0x77] %v750
        %753 = vst [vmem:[%s539 + $0x8] sm:$0x77] %v751
        %s754 = sand.u32 %s90, 1
        %s755 = sand.u32 %s90, 1
        %s756 = smul.addr %s755, 16
        %s757 = scalar_lea.vmem [#allocation3], %s756
        // Predicated region
        $region99: #{base_forward.5} parent=93 // pred_check
          %p758 = pneg %p100
        $region100: #{base_forward.5} parent=93 // pred_check_branch
          %760 = sbr.rel (%p758) target = $region102
        $region101: #{base_forward.5} parent=93 // pred_region
          %s761 = smul.u32 4, %s14
          %s762 = ssub.s32 13, %s761
          %p763 = scmp.lt.s32.totalorder %s762, 4
          %s764 = scalar_select %p763, %s762, 4
          %s765 = smul.u32 4, %s764
          %p766 = scmp.ne.s32.totalorder 0, %s765
          %s767 = smul.addr %s761, 4
          %s768 = scalar_lea.vmem %s3, %s767
          %s769 = smul.u32 %s764, 4
          // Predicated region
          $region103: #{base_forward.5} parent=101 // pred_check
            %p770 = pneg %p766
          $region104: #{base_forward.5} parent=101 // pred_check_branch
            %772 = sbr.rel (%p770) target = $region106
          $region105: #{base_forward.5} parent=101 // pred_region
            %p773 = scmp.lt.u32.totalorder %s769, 8
            %p774 = pneg %p773
            // Predicated region
            $region107: #{base_forward.5} parent=105 // pred_check
              _
            $region108: #{base_forward.5} parent=105 // pred_check_branch
              %776 = sbr.rel (%p773) target = $region110
            $region109: #{base_forward.5} parent=105 // pred_region
              %s792 = sand.u32 %s769, 7
              %p793 = scmp.eq.s32.totalorder %s792, 0
              // Predicated region
              $region122: #{base_forward.5} parent=109 // pred_check
                %p794 = pneg %p793
              $region123: #{base_forward.5} parent=109 // pred_check_branch
                %796 = sbr.rel (%p794) target = $region125
              $region124: #{base_forward.5} parent=109 // pred_region
                %s797 = sshrl.u32 %s769, 3
                %s798 = sshrl.u32 %s797, 5
                // While loop
                $region126: #{base_forward.5} parent=124 // loop_pre_header
                  _
                $region127: #{base_forward.5} parent=124 // loop_header
                  %s800 = sphi 0, %s802
                  %p801 = scmp.ge.s32.totalorder %s800, %s798
                  %s805 = sphi 0, %s874
                  %s806 = sphi %s757, %s877
                  %s807 = sphi %s768, %s878
                $region128: #{base_forward.5} parent=124 // loop_header_branch
                  %804 = sbr.rel (%p801) target = $region132
                $region129: #{base_forward.5} parent=124 // loop_body
                  %v808 = vld [vmem:[%s806] sm:$0xff]
                  %809 = vst [vmem:[%s807] sm:$0xff] %v808
                  %v810 = vld [vmem:[%s806 + $0x8] sm:$0xff]
                  %811 = vst [vmem:[%s807 + $0x8] sm:$0xff] %v810
                  %v812 = vld [vmem:[%s806 + $0x10] sm:$0xff]
                  %813 = vst [vmem:[%s807 + $0x10] sm:$0xff] %v812
                  %v814 = vld [vmem:[%s806 + $0x18] sm:$0xff]
                  %815 = vst [vmem:[%s807 + $0x18] sm:$0xff] %v814
                  %v816 = vld [vmem:[%s806 + $0x20] sm:$0xff]
                  %817 = vst [vmem:[%s807 + $0x20] sm:$0xff] %v816
                  %v818 = vld [vmem:[%s806 + $0x28] sm:$0xff]
                  %819 = vst [vmem:[%s807 + $0x28] sm:$0xff] %v818
                  %v820 = vld [vmem:[%s806 + $0x30] sm:$0xff]
                  %821 = vst [vmem:[%s807 + $0x30] sm:$0xff] %v820
                  %v822 = vld [vmem:[%s806 + $0x38] sm:$0xff]
                  %823 = vst [vmem:[%s807 + $0x38] sm:$0xff] %v822
                  %v824 = vld [vmem:[%s806 + $0x40] sm:$0xff]
                  %825 = vst [vmem:[%s807 + $0x40] sm:$0xff] %v824
                  %v826 = vld [vmem:[%s806 + $0x48] sm:$0xff]
                  %827 = vst [vmem:[%s807 + $0x48] sm:$0xff] %v826
                  %v828 = vld [vmem:[%s806 + $0x50] sm:$0xff]
                  %829 = vst [vmem:[%s807 + $0x50] sm:$0xff] %v828
                  %v830 = vld [vmem:[%s806 + $0x58] sm:$0xff]
                  %831 = vst [vmem:[%s807 + $0x58] sm:$0xff] %v830
                  %v832 = vld [vmem:[%s806 + $0x60] sm:$0xff]
                  %833 = vst [vmem:[%s807 + $0x60] sm:$0xff] %v832
                  %v834 = vld [vmem:[%s806 + $0x68] sm:$0xff]
                  %835 = vst [vmem:[%s807 + $0x68] sm:$0xff] %v834
                  %v836 = vld [vmem:[%s806 + $0x70] sm:$0xff]
                  %837 = vst [vmem:[%s807 + $0x70] sm:$0xff] %v836
                  %v838 = vld [vmem:[%s806 + $0x78] sm:$0xff]
                  %839 = vst [vmem:[%s807 + $0x78] sm:$0xff] %v838
                  %v840 = vld [vmem:[%s806 + $0x80] sm:$0xff]
                  %841 = vst [vmem:[%s807 + $0x80] sm:$0xff] %v840
                  %v842 = vld [vmem:[%s806 + $0x88] sm:$0xff]
                  %843 = vst [vmem:[%s807 + $0x88] sm:$0xff] %v842
                  %v844 = vld [vmem:[%s806 + $0x90] sm:$0xff]
                  %845 = vst [vmem:[%s807 + $0x90] sm:$0xff] %v844
                  %v846 = vld [vmem:[%s806 + $0x98] sm:$0xff]
                  %847 = vst [vmem:[%s807 + $0x98] sm:$0xff] %v846
                  %v848 = vld [vmem:[%s806 + $0xa0] sm:$0xff]
                  %849 = vst [vmem:[%s807 + $0xa0] sm:$0xff] %v848
                  %v850 = vld [vmem:[%s806 + $0xa8] sm:$0xff]
                  %851 = vst [vmem:[%s807 + $0xa8] sm:$0xff] %v850
                  %v852 = vld [vmem:[%s806 + $0xb0] sm:$0xff]
                  %853 = vst [vmem:[%s807 + $0xb0] sm:$0xff] %v852
                  %v854 = vld [vmem:[%s806 + $0xb8] sm:$0xff]
                  %855 = vst [vmem:[%s807 + $0xb8] sm:$0xff] %v854
                  %v856 = vld [vmem:[%s806 + $0xc0] sm:$0xff]
                  %857 = vst [vmem:[%s807 + $0xc0] sm:$0xff] %v856
                  %v858 = vld [vmem:[%s806 + $0xc8] sm:$0xff]
                  %859 = vst [vmem:[%s807 + $0xc8] sm:$0xff] %v858
                  %v860 = vld [vmem:[%s806 + $0xd0] sm:$0xff]
                  %861 = vst [vmem:[%s807 + $0xd0] sm:$0xff] %v860
                  %v862 = vld [vmem:[%s806 + $0xd8] sm:$0xff]
                  %863 = vst [vmem:[%s807 + $0xd8] sm:$0xff] %v862
                  %v864 = vld [vmem:[%s806 + $0xe0] sm:$0xff]
                  %865 = vst [vmem:[%s807 + $0xe0] sm:$0xff] %v864
                  %v866 = vld [vmem:[%s806 + $0xe8] sm:$0xff]
                  %867 = vst [vmem:[%s807 + $0xe8] sm:$0xff] %v866
                  %v868 = vld [vmem:[%s806 + $0xf0] sm:$0xff]
                  %869 = vst [vmem:[%s807 + $0xf0] sm:$0xff] %v868
                  %v870 = vld [vmem:[%s806 + $0xf8] sm:$0xff]
                  %871 = vst [vmem:[%s807 + $0xf8] sm:$0xff] %v870
                  %s872 = sadd.s32 1, %s805
                  %p873 = scmp.ge.s32.totalorder %s872, %s798
                  %s874 = scalar_select %p873, 0, %s872
                  %s875 = smul.u32 %s874, 256
                  %s876 = smul.u32 %s874, 256
                  %s877 = scalar_lea.vmem %s757, %s875 [#allocation3]
                  %s878 = scalar_lea.vmem %s768, %s876
                $region130: #{base_forward.5} parent=124 // loop_footer
                  %s802 = sadd.s32 %s800, 1
                $region131: #{base_forward.5} parent=124 // loop_footer_branch
                  %799 = sbr.rel target = $region127
                $region132: #{base_forward.5} parent=124 // loop_exit
                  _
                %s879 = sshrl.u32 %s797, 5
                %s880 = sand.u32 %s797, 31
                %s881 = smul.u32 %s879, 32
                %s882 = smul.u32 8, %s881
                %s883 = scalar_lea.vmem %s757, %s882 [#allocation3]
                %s884 = smul.u32 8, %s881
                %s885 = scalar_lea.vmem %s768, %s884
                // While loop
                $region133: #{base_forward.5} parent=124 // loop_pre_header
                  _
                $region134: #{base_forward.5} parent=124 // loop_header
                  %s887 = sphi 0, %s889
                  %p888 = scmp.ge.s32.totalorder %s887, %s880
                  %s892 = sphi 0, %s899
                  %s893 = sphi %s883, %s902
                  %s894 = sphi %s885, %s903
                $region135: #{base_forward.5} parent=124 // loop_header_branch
                  %891 = sbr.rel (%p888) target = $region139
                $region136: #{base_forward.5} parent=124 // loop_body
                  %v895 = vld [vmem:[%s893] sm:$0xff]
                  %896 = vst [vmem:[%s894] sm:$0xff] %v895
                  %s897 = sadd.s32 1, %s892
                  %p898 = scmp.ge.s32.totalorder %s897, %s880
                  %s899 = scalar_select %p898, 0, %s897
                  %s900 = smul.u32 %s899, 8
                  %s901 = smul.u32 %s899, 8
                  %s902 = scalar_lea.vmem %s883, %s900 [#allocation3]
                  %s903 = scalar_lea.vmem %s885, %s901
                $region137: #{base_forward.5} parent=124 // loop_footer
                  %s889 = sadd.s32 %s887, 1
                $region138: #{base_forward.5} parent=124 // loop_footer_branch
                  %886 = sbr.rel target = $region134
                $region139: #{base_forward.5} parent=124 // loop_exit
                  _
              $region125: #{base_forward.5} parent=109 // pred_fallthru
                _
              %p904 = pneg %p793
              // Predicated region
              $region140: #{base_forward.5} parent=109 // pred_check
                _
              $region141: #{base_forward.5} parent=109 // pred_check_branch
                %906 = sbr.rel (%p793) target = $region143
              $region142: #{base_forward.5} parent=109 // pred_region
                %s907 = sand.u32 %s769, 7
                %s908 = ssub.s32 %s769, %s907
                %s909 = scalar_lea.vmem %s757, %s908 [#allocation3]
                %s910 = ssub.s32 %s769, %s907
                %s911 = scalar_lea.vmem %s768, %s910
                %s912 = sshrl.u32 %s769, 3
                %s913 = sshrl.u32 %s912, 5
                // While loop
                $region144: #{base_forward.5} parent=142 // loop_pre_header
                  _
                $region145: #{base_forward.5} parent=142 // loop_header
                  %s915 = sphi 0, %s917
                  %p916 = scmp.ge.s32.totalorder %s915, %s913
                  %s920 = sphi 0, %s989
                  %s921 = sphi %s757, %s992
                  %s922 = sphi %s768, %s993
                $region146: #{base_forward.5} parent=142 // loop_header_branch
                  %919 = sbr.rel (%p916) target = $region150
                $region147: #{base_forward.5} parent=142 // loop_body
                  %v923 = vld [vmem:[%s921] sm:$0xff]
                  %924 = vst [vmem:[%s922] sm:$0xff] %v923
                  %v925 = vld [vmem:[%s921 + $0x8] sm:$0xff]
                  %926 = vst [vmem:[%s922 + $0x8] sm:$0xff] %v925
                  %v927 = vld [vmem:[%s921 + $0x10] sm:$0xff]
                  %928 = vst [vmem:[%s922 + $0x10] sm:$0xff] %v927
                  %v929 = vld [vmem:[%s921 + $0x18] sm:$0xff]
                  %930 = vst [vmem:[%s922 + $0x18] sm:$0xff] %v929
                  %v931 = vld [vmem:[%s921 + $0x20] sm:$0xff]
                  %932 = vst [vmem:[%s922 + $0x20] sm:$0xff] %v931
                  %v933 = vld [vmem:[%s921 + $0x28] sm:$0xff]
                  %934 = vst [vmem:[%s922 + $0x28] sm:$0xff] %v933
                  %v935 = vld [vmem:[%s921 + $0x30] sm:$0xff]
                  %936 = vst [vmem:[%s922 + $0x30] sm:$0xff] %v935
                  %v937 = vld [vmem:[%s921 + $0x38] sm:$0xff]
                  %938 = vst [vmem:[%s922 + $0x38] sm:$0xff] %v937
                  %v939 = vld [vmem:[%s921 + $0x40] sm:$0xff]
                  %940 = vst [vmem:[%s922 + $0x40] sm:$0xff] %v939
                  %v941 = vld [vmem:[%s921 + $0x48] sm:$0xff]
                  %942 = vst [vmem:[%s922 + $0x48] sm:$0xff] %v941
                  %v943 = vld [vmem:[%s921 + $0x50] sm:$0xff]
                  %944 = vst [vmem:[%s922 + $0x50] sm:$0xff] %v943
                  %v945 = vld [vmem:[%s921 + $0x58] sm:$0xff]
                  %946 = vst [vmem:[%s922 + $0x58] sm:$0xff] %v945
                  %v947 = vld [vmem:[%s921 + $0x60] sm:$0xff]
                  %948 = vst [vmem:[%s922 + $0x60] sm:$0xff] %v947
                  %v949 = vld [vmem:[%s921 + $0x68] sm:$0xff]
                  %950 = vst [vmem:[%s922 + $0x68] sm:$0xff] %v949
                  %v951 = vld [vmem:[%s921 + $0x70] sm:$0xff]
                  %952 = vst [vmem:[%s922 + $0x70] sm:$0xff] %v951
                  %v953 = vld [vmem:[%s921 + $0x78] sm:$0xff]
                  %954 = vst [vmem:[%s922 + $0x78] sm:$0xff] %v953
                  %v955 = vld [vmem:[%s921 + $0x80] sm:$0xff]
                  %956 = vst [vmem:[%s922 + $0x80] sm:$0xff] %v955
                  %v957 = vld [vmem:[%s921 + $0x88] sm:$0xff]
                  %958 = vst [vmem:[%s922 + $0x88] sm:$0xff] %v957
                  %v959 = vld [vmem:[%s921 + $0x90] sm:$0xff]
                  %960 = vst [vmem:[%s922 + $0x90] sm:$0xff] %v959
                  %v961 = vld [vmem:[%s921 + $0x98] sm:$0xff]
                  %962 = vst [vmem:[%s922 + $0x98] sm:$0xff] %v961
                  %v963 = vld [vmem:[%s921 + $0xa0] sm:$0xff]
                  %964 = vst [vmem:[%s922 + $0xa0] sm:$0xff] %v963
                  %v965 = vld [vmem:[%s921 + $0xa8] sm:$0xff]
                  %966 = vst [vmem:[%s922 + $0xa8] sm:$0xff] %v965
                  %v967 = vld [vmem:[%s921 + $0xb0] sm:$0xff]
                  %968 = vst [vmem:[%s922 + $0xb0] sm:$0xff] %v967
                  %v969 = vld [vmem:[%s921 + $0xb8] sm:$0xff]
                  %970 = vst [vmem:[%s922 + $0xb8] sm:$0xff] %v969
                  %v971 = vld [vmem:[%s921 + $0xc0] sm:$0xff]
                  %972 = vst [vmem:[%s922 + $0xc0] sm:$0xff] %v971
                  %v973 = vld [vmem:[%s921 + $0xc8] sm:$0xff]
                  %974 = vst [vmem:[%s922 + $0xc8] sm:$0xff] %v973
                  %v975 = vld [vmem:[%s921 + $0xd0] sm:$0xff]
                  %976 = vst [vmem:[%s922 + $0xd0] sm:$0xff] %v975
                  %v977 = vld [vmem:[%s921 + $0xd8] sm:$0xff]
                  %978 = vst [vmem:[%s922 + $0xd8] sm:$0xff] %v977
                  %v979 = vld [vmem:[%s921 + $0xe0] sm:$0xff]
                  %980 = vst [vmem:[%s922 + $0xe0] sm:$0xff] %v979
                  %v981 = vld [vmem:[%s921 + $0xe8] sm:$0xff]
                  %982 = vst [vmem:[%s922 + $0xe8] sm:$0xff] %v981
                  %v983 = vld [vmem:[%s921 + $0xf0] sm:$0xff]
                  %984 = vst [vmem:[%s922 + $0xf0] sm:$0xff] %v983
                  %v985 = vld [vmem:[%s921 + $0xf8] sm:$0xff]
                  %986 = vst [vmem:[%s922 + $0xf8] sm:$0xff] %v985
                  %s987 = sadd.s32 1, %s920
                  %p988 = scmp.ge.s32.totalorder %s987, %s913
                  %s989 = scalar_select %p988, 0, %s987
                  %s990 = smul.u32 %s989, 256
                  %s991 = smul.u32 %s989, 256
                  %s992 = scalar_lea.vmem %s757, %s990 [#allocation3]
                  %s993 = scalar_lea.vmem %s768, %s991
                $region148: #{base_forward.5} parent=142 // loop_footer
                  %s917 = sadd.s32 %s915, 1
                $region149: #{base_forward.5} parent=142 // loop_footer_branch
                  %914 = sbr.rel target = $region145
                $region150: #{base_forward.5} parent=142 // loop_exit
                  _
                %s994 = sshrl.u32 %s912, 5
                %s995 = sand.u32 %s912, 31
                %s996 = smul.u32 %s994, 32
                %s997 = smul.u32 8, %s996
                %s998 = scalar_lea.vmem %s757, %s997 [#allocation3]
                %s999 = smul.u32 8, %s996
                %s1000 = scalar_lea.vmem %s768, %s999
                // While loop
                $region151: #{base_forward.5} parent=142 // loop_pre_header
                  _
                $region152: #{base_forward.5} parent=142 // loop_header
                  %s1002 = sphi 0, %s1004
                  %p1003 = scmp.ge.s32.totalorder %s1002, %s995
                  %s1007 = sphi 0, %s1014
                  %s1008 = sphi %s998, %s1017
                  %s1009 = sphi %s1000, %s1018
                $region153: #{base_forward.5} parent=142 // loop_header_branch
                  %1006 = sbr.rel (%p1003) target = $region157
                $region154: #{base_forward.5} parent=142 // loop_body
                  %v1010 = vld [vmem:[%s1008] sm:$0xff]
                  %1011 = vst [vmem:[%s1009] sm:$0xff] %v1010
                  %s1012 = sadd.s32 1, %s1007
                  %p1013 = scmp.ge.s32.totalorder %s1012, %s995
                  %s1014 = scalar_select %p1013, 0, %s1012
                  %s1015 = smul.u32 %s1014, 8
                  %s1016 = smul.u32 %s1014, 8
                  %s1017 = scalar_lea.vmem %s998, %s1015 [#allocation3]
                  %s1018 = scalar_lea.vmem %s1000, %s1016
                $region155: #{base_forward.5} parent=142 // loop_footer
                  %s1004 = sadd.s32 %s1002, 1
                $region156: #{base_forward.5} parent=142 // loop_footer_branch
                  %1001 = sbr.rel target = $region152
                $region157: #{base_forward.5} parent=142 // loop_exit
                  _
                %s1019 = sshll.u32 1, %s907
                %s1020 = ssub.s32 %s1019, 1
                loop: start=0, step=1, limit=1
                $region158: #{base_forward.5} parent=142 // loop_pre_header
                  _
                $region159: #{base_forward.5} parent=142 // loop_header
                  %s1022 = sphi 0, %s1026
                  %p1023 = scmp.ge.s32.totalorder %s1022, 1
                  %s1027 = sphi %s909, %s909
                  %s1028 = sphi %s911, %s911
                $region160: #{base_forward.5} parent=142 // loop_header_branch
                  %1025 = sbr.rel (%p1023) target = $region164
                $region161: #{base_forward.5} parent=142 // loop_body
                  %v1029 = vld [vmem:[%s1027] sm:%s1020]
                  %1030 = vst [vmem:[%s1028] sm:%s1020] %v1029
                $region162: #{base_forward.5} parent=142 // loop_footer
                  %s1026 = sadd.s32 1, %s1022
                $region163: #{base_forward.5} parent=142 // loop_footer_branch
                  %1021 = sbr.rel target = $region159
                $region164: #{base_forward.5} parent=142 // loop_exit
                  _
              $region143: #{base_forward.5} parent=109 // pred_fallthru
                _
            $region110: #{base_forward.5} parent=105 // pred_fallthru
              _
            // Predicated region
            $region111: #{base_forward.5} parent=105 // pred_check
              %p777 = pneg %p773
            $region112: #{base_forward.5} parent=105 // pred_check_branch
              %779 = sbr.rel (%p777) target = $region114
            $region113: #{base_forward.5} parent=105 // pred_region
              %s780 = sshll.u32 1, %s769
              %s781 = ssub.s32 %s780, 1
              loop: start=0, step=1, limit=1
              $region115: #{base_forward.5} parent=113 // loop_pre_header
                _
              $region116: #{base_forward.5} parent=113 // loop_header
                %s783 = sphi 0, %s787
                %p784 = scmp.ge.s32.totalorder %s783, 1
                %s788 = sphi %s757, %s757
                %s789 = sphi %s768, %s768
              $region117: #{base_forward.5} parent=113 // loop_header_branch
                %786 = sbr.rel (%p784) target = $region121
              $region118: #{base_forward.5} parent=113 // loop_body
                %v790 = vld [vmem:[%s788] sm:%s781]
                %791 = vst [vmem:[%s789] sm:%s781] %v790
              $region119: #{base_forward.5} parent=113 // loop_footer
                %s787 = sadd.s32 1, %s783
              $region120: #{base_forward.5} parent=113 // loop_footer_branch
                %782 = sbr.rel target = $region116
              $region121: #{base_forward.5} parent=113 // loop_exit
                _
            $region114: #{base_forward.5} parent=105 // pred_fallthru
              _
          $region106: #{base_forward.5} parent=101 // pred_fallthru
            _
          %1031 = vnop
        $region102: #{base_forward.5} parent=93 // pred_fallthru
          _
      $region94: #{base_forward.5} parent=5 // pred_fallthru
        _
      %p1032 = scmp.le.s32.totalorder 2, %s9
      // Predicated region
      $region165: #{base_forward.5} parent=5 // pred_check
        %p1033 = pneg %p1032
      $region166: #{base_forward.5} parent=5 // pred_check_branch
        %1035 = sbr.rel (%p1033) target = $region168
      $region167: #{base_forward.5} parent=5 // pred_region
        %s1036 = ssub.s32 %s9, 2
        // Predicated region
        $region169: #{base_forward.5} parent=167 // pred_check
          %p1037 = pneg %p106
        $region170: #{base_forward.5} parent=167 // pred_check_branch
          %1039 = sbr.rel (%p1037) target = $region172
        $region171: #{base_forward.5} parent=167 // pred_region
          %s1040 = sand.u32 %s91, 1
          %s1041 = sand.u32 %s91, 1
          %s1042 = smul.addr %s1041, 16
          %s1043 = scalar_lea.vmem [#allocation3], %s1042
        $region172: #{base_forward.5} parent=167 // pred_fallthru
          _
      $region168: #{base_forward.5} parent=5 // pred_fallthru
        _
    $region6: #{base_forward.5} parent=1 // loop_footer
      %s13 = sadd.s32 1, %s9
    $region7: #{base_forward.5} parent=1 // loop_footer_branch
      %8 = sbr.rel target = $region3
    $region8: #{base_forward.5} parent=1 // loop_exit
      _

// kernel: base_forward.6
$region0: #{base_forward.6}
  #allocation0 [shape = 'u32[]', space=smem, size = 0x4, offset = 0x4, fixed_abs, tag = 'smem constant byte address 0x4 - core index']
  #allocation1 [shape = 'u32[72,128]{1,0:T(1,128)}', space=vmem, size = 0x9000, scoped, tag = 'internal scratch']
  %s0 = inlined_call_operand.vmem [shape: bf16[1,2352], index: 0, kind: input, shape index: {}]
  %s1 = inlined_call_operand.vmem [shape: bf16[1,2352], index: 1, kind: input, shape index: {}]
  %s2 = inlined_call_operand.vmem [shape: bf16[1,2352], index: 2, kind: input, shape index: {}]
  %s3 = inlined_call_operand.vmem [shape: bf16[1,2352], index: 3, kind: input, shape index: {}]
  %s4 = inlined_call_operand.vmem [shape: bf16[1,2352], index: 4, kind: output, shape index: {}]
  %s5 = sld [smem:[#allocation0]]
  $region26: #{base_forward.6} parent=0
    _
  %s7 = ssub.s32 1, %s5
  %s8 = scalar_select 0, %s7, %s5
  // Predicated region
  $region2: #{base_forward.6} parent=0 // pred_check
    _
  $region3: #{base_forward.6} parent=0 // pred_check_branch
    %10 = sbr.rel (0) target = $region5
  $region4: #{base_forward.6} parent=0 // pred_region
    _
  $region5: #{base_forward.6} parent=0 // pred_fallthru
    _
  // Predicated region
  $region6: #{base_forward.6} parent=0 // pred_check
    _
  $region7: #{base_forward.6} parent=0 // pred_check_branch
    %12 = sbr.rel (0) target = $region9
  $region8: #{base_forward.6} parent=0 // pred_region
    _
  $region9: #{base_forward.6} parent=0 // pred_fallthru
    _
  // Predicated region
  $region10: #{base_forward.6} parent=0 // pred_check
    _
  $region11: #{base_forward.6} parent=0 // pred_check_branch
    %14 = sbr.rel (0) target = $region13
  $region12: #{base_forward.6} parent=0 // pred_region
    _
  $region13: #{base_forward.6} parent=0 // pred_fallthru
    _
  // Predicated region
  $region14: #{base_forward.6} parent=0 // pred_check
    _
  $region15: #{base_forward.6} parent=0 // pred_check_branch
    %16 = sbr.rel (0) target = $region17
  $region16: #{base_forward.6} parent=0 // pred_region
    _
  $region17: #{base_forward.6} parent=0 // pred_fallthru
    _
  %v17 = vld [vmem:[%s0] sm:$0xff]
  %v18 = vld [vmem:[%s0 + $0x8] sm:$0xff]
  %v19 = vld [vmem:[%s0 + $0x10] sm:$0x7]
  %v20 = vld [vmem:[%s1] sm:$0xff]
  %v21 = vld [vmem:[%s1 + $0x8] sm:$0xff]
  %v22 = vld [vmem:[%s1 + $0x10] sm:$0x7]
  %v23 = vunpack.c.l.bf16 %v17
  %v24 = vunpack.c.h.bf16 %v17
  %v25 = vunpack.c.l.bf16 %v18
  %v26 = vunpack.c.h.bf16 %v18
  %v27 = vunpack.c.l.bf16 %v19
  %v28 = vunpack.c.l.bf16 %v20
  %v29 = vunpack.c.h.bf16 %v20
  %v30 = vunpack.c.l.bf16 %v21
  %v31 = vunpack.c.h.bf16 %v21
  %v32 = vunpack.c.l.bf16 %v22
  %v33 = vmax.f32 %v23, %v28
  %v34 = vmax.f32 %v24, %v29
  %v35 = vmax.f32 %v25, %v30
  %v36 = vmax.f32 %v26, %v31
  %v37 = vmax.f32 %v27, %v32
  %v43 = vperm.slane %v33, 0
  %v44 = vperm.slane %v33, 2
  %v45 = vperm.slane %v33, 4
  %v46 = vperm.slane %v33, 6
  %v47 = vperm.slane %v34, 0
  %v48 = vperm.slane %v34, 2
  %v49 = vperm.slane %v34, 4
  %v50 = vperm.slane %v34, 6
  %v51 = vperm.slane %v35, 0
  %v52 = vperm.slane %v35, 2
  %v53 = vperm.slane %v35, 4
  %v54 = vperm.slane %v35, 6
  %v55 = vperm.slane %v36, 0
  %v56 = vperm.slane %v36, 2
  %v57 = vperm.slane %v36, 4
  %v58 = vperm.slane %v36, 6
  %v59 = vperm.slane %v37, 0
  %v60 = vperm.slane %v37, 2
  %v61 = vperm.slane %v37, 4
  %v81 = vpack.c.bf16 %v44, %v43
  %v82 = vpack.c.bf16 %v46, %v45
  %v83 = vpack.c.bf16 %v48, %v47
  %v84 = vpack.c.bf16 %v50, %v49
  %v85 = vpack.c.bf16 %v52, %v51
  %v86 = vpack.c.bf16 %v54, %v53
  %v87 = vpack.c.bf16 %v56, %v55
  %v88 = vpack.c.bf16 %v58, %v57
  %v89 = vpack.c.bf16 %v60, %v59
  %v90 = vpack.c.bf16 %v61, %v61
  %v91 = vld [vmem:[%s2] sm:$0xff]
  %v92 = vld [vmem:[%s2 + $0x8] sm:$0xff]
  %v93 = vld [vmem:[%s2 + $0x10] sm:$0x7]
  %v94 = vld [vmem:[%s3] sm:$0xff]
  %v95 = vld [vmem:[%s3 + $0x8] sm:$0xff]
  %v96 = vld [vmem:[%s3 + $0x10] sm:$0x7]
  %v97 = vunpack.c.l.bf16 %v91
  %v98 = vunpack.c.h.bf16 %v91
  %v99 = vunpack.c.l.bf16 %v92
  %v100 = vunpack.c.h.bf16 %v92
  %v101 = vunpack.c.l.bf16 %v93
  %v102 = vunpack.c.l.bf16 %v94
  %v103 = vunpack.c.h.bf16 %v94
  %v104 = vunpack.c.l.bf16 %v95
  %v105 = vunpack.c.h.bf16 %v95
  %v106 = vunpack.c.l.bf16 %v96
  %v107 = vmax.f32 %v97, %v102
  %v108 = vmax.f32 %v98, %v103
  %v109 = vmax.f32 %v99, %v104
  %v110 = vmax.f32 %v100, %v105
  %v111 = vmax.f32 %v101, %v106
  %v117 = vperm.slane %v107, 0
  %v118 = vperm.slane %v107, 2
  %v119 = vperm.slane %v107, 4
  %v120 = vperm.slane %v107, 6
  %v121 = vperm.slane %v108, 0
  %v122 = vperm.slane %v108, 2
  %v123 = vperm.slane %v108, 4
  %v124 = vperm.slane %v108, 6
  %v125 = vperm.slane %v109, 0
  %v126 = vperm.slane %v109, 2
  %v127 = vperm.slane %v109, 4
  %v128 = vperm.slane %v109, 6
  %v129 = vperm.slane %v110, 0
  %v130 = vperm.slane %v110, 2
  %v131 = vperm.slane %v110, 4
  %v132 = vperm.slane %v110, 6
  %v133 = vperm.slane %v111, 0
  %v134 = vperm.slane %v111, 2
  %v135 = vperm.slane %v111, 4
  %v155 = vpack.c.bf16 %v118, %v117
  %v156 = vpack.c.bf16 %v120, %v119
  %v157 = vpack.c.bf16 %v122, %v121
  %v158 = vpack.c.bf16 %v124, %v123
  %v159 = vpack.c.bf16 %v126, %v125
  %v160 = vpack.c.bf16 %v128, %v127
  %v161 = vpack.c.bf16 %v130, %v129
  %v162 = vpack.c.bf16 %v132, %v131
  %v163 = vpack.c.bf16 %v134, %v133
  %v164 = vpack.c.bf16 %v135, %v135
  %v165 = vunpack.c.l.bf16 %v81
  %v166 = vunpack.c.h.bf16 %v81
  %v167 = vunpack.c.l.bf16 %v82
  %v168 = vunpack.c.h.bf16 %v82
  %v169 = vunpack.c.l.bf16 %v83
  %v170 = vunpack.c.h.bf16 %v83
  %v171 = vunpack.c.l.bf16 %v84
  %v172 = vunpack.c.h.bf16 %v84
  %v173 = vunpack.c.l.bf16 %v85
  %v174 = vunpack.c.h.bf16 %v85
  %v175 = vunpack.c.l.bf16 %v86
  %v176 = vunpack.c.h.bf16 %v86
  %v177 = vunpack.c.l.bf16 %v87
  %v178 = vunpack.c.h.bf16 %v87
  %v179 = vunpack.c.l.bf16 %v88
  %v180 = vunpack.c.h.bf16 %v88
  %v181 = vunpack.c.l.bf16 %v89
  %v182 = vunpack.c.h.bf16 %v89
  %v183 = vunpack.c.l.bf16 %v90
  %v184 = vunpack.c.l.bf16 %v155
  %v185 = vunpack.c.h.bf16 %v155
  %v186 = vunpack.c.l.bf16 %v156
  %v187 = vunpack.c.h.bf16 %v156
  %v188 = vunpack.c.l.bf16 %v157
  %v189 = vunpack.c.h.bf16 %v157
  %v190 = vunpack.c.l.bf16 %v158
  %v191 = vunpack.c.h.bf16 %v158
  %v192 = vunpack.c.l.bf16 %v159
  %v193 = vunpack.c.h.bf16 %v159
  %v194 = vunpack.c.l.bf16 %v160
  %v195 = vunpack.c.h.bf16 %v160
  %v196 = vunpack.c.l.bf16 %v161
  %v197 = vunpack.c.h.bf16 %v161
  %v198 = vunpack.c.l.bf16 %v162
  %v199 = vunpack.c.h.bf16 %v162
  %v200 = vunpack.c.l.bf16 %v163
  %v201 = vunpack.c.h.bf16 %v163
  %v202 = vunpack.c.l.bf16 %v164
  %v203 = vmax.f32 %v165, %v184
  %v204 = vmax.f32 %v166, %v185
  %v205 = vmax.f32 %v167, %v186
  %v206 = vmax.f32 %v168, %v187
  %v207 = vmax.f32 %v169, %v188
  %v208 = vmax.f32 %v170, %v189
  %v209 = vmax.f32 %v171, %v190
  %v210 = vmax.f32 %v172, %v191
  %v211 = vmax.f32 %v173, %v192
  %v212 = vmax.f32 %v174, %v193
  %v213 = vmax.f32 %v175, %v194
  %v214 = vmax.f32 %v176, %v195
  %v215 = vmax.f32 %v177, %v196
  %v216 = vmax.f32 %v178, %v197
  %v217 = vmax.f32 %v179, %v198
  %v218 = vmax.f32 %v180, %v199
  %v219 = vmax.f32 %v181, %v200
  %v220 = vmax.f32 %v182, %v201
  %v221 = vmax.f32 %v183, %v202
  %v222 = vpack.c.bf16 %v204, %v203
  %v223 = vpack.c.bf16 %v206, %v205
  %v224 = vpack.c.bf16 %v208, %v207
  %v225 = vpack.c.bf16 %v210, %v209
  %v226 = vpack.c.bf16 %v212, %v211
  %v227 = vpack.c.bf16 %v214, %v213
  %v228 = vpack.c.bf16 %v216, %v215
  %v229 = vpack.c.bf16 %v218, %v217
  %v230 = vpack.c.bf16 %v220, %v219
  %v231 = vpack.c.bf16 %v221, %v221
  %v242 = vrot.slane %v222, 3
  %v243 = vrot.slane %v223, 6
  %v244 = vrot.slane %v223, 1
  %v245 = vrot.slane %v224, 4
  %v246 = vrot.slane %v224, 7
  %v247 = vrot.slane %v225, 2
  %v248 = vrot.slane %v225, 5
  %v249 = vrot.slane %v226, 3
  %v250 = vrot.slane %v227, 6
  %v251 = vrot.slane %v227, 1
  %v252 = vrot.slane %v228, 4
  %v253 = vrot.slane %v228, 7
  %v254 = vrot.slane %v229, 2
  %v255 = vrot.slane %v229, 5
  %v256 = vrot.slane %v230, 3
  %v257 = vrot.slane %v231, 6
  %v258 = vrot.slane %v231, 1
  %vm259 = vcmask 1040384
  %v262 = vsel %vm259, %v222, %v242
  %vm263 = vcmask 1042434
  %v266 = vsel %vm263, %v243, %v244
  %vm267 = vcmask 1041408
  %v268 = vsel %vm267, %v262, %v266
  %vm269 = vcmask 1044484
  %v272 = vsel %vm269, %v245, %v246
  %vm273 = vcmask 1046534
  %v276 = vsel %vm273, %v247, %v248
  %vm277 = vcmask 1045508
  %v278 = vsel %vm277, %v272, %v276
  %vm279 = vcmask 1043456
  %v280 = vsel %vm279, %v268, %v278
  %v283 = vsel %vm259, %v226, %v249
  %v286 = vsel %vm263, %v250, %v251
  %v287 = vsel %vm267, %v283, %v286
  %v290 = vsel %vm269, %v252, %v253
  %v293 = vsel %vm273, %v254, %v255
  %v294 = vsel %vm277, %v290, %v293
  %v295 = vsel %vm279, %v287, %v294
  %v298 = vsel %vm259, %v230, %v256
  %v301 = vsel %vm263, %v257, %v258
  %v302 = vsel %vm267, %v298, %v301
  %vm306 = vcmask 1040384
  %vm307 = vsmask.f32 256
  %vm308 = vmand %vm306, %vm307
  %vm309 = vcmask 1041409
  %vm310 = vsmask.f32 1280
  %vm311 = vmand %vm309, %vm310
  %vm312 = vmor %vm311, %vm308
  %vm313 = vcmask 1042434
  %vm314 = vsmask.f32 2304
  %vm315 = vmand %vm313, %vm314
  %vm316 = vmor %vm315, %vm312
  %vm317 = vcmask 1043459
  %vm318 = vsmask.f32 3328
  %vm319 = vmand %vm317, %vm318
  %vm320 = vmor %vm319, %vm316
  %vm321 = vcmask 1044484
  %vm322 = vsmask.f32 4352
  %vm323 = vmand %vm321, %vm322
  %vm324 = vmor %vm323, %vm320
  %vm325 = vcmask 1045509
  %vm326 = vsmask.f32 5376
  %vm327 = vmand %vm325, %vm326
  %vm328 = vmor %vm327, %vm324
  %vm329 = vcmask 1046534
  %vm330 = vsmask.f32 6400
  %vm331 = vmand %vm329, %vm330
  %vm332 = vmor %vm331, %vm328
  %vm333 = vcmask 1047559
  %vm334 = vsmask.f32 7424
  %vm335 = vmand %vm333, %vm334
  %vm336 = vmor %vm335, %vm332
  %v337 = vld [vmem:[%s4] sm:$0xff]
  %v338 = vsel %vm336, %v280, %v337
  %339 = vst [vmem:[%s4] sm:$0xff] %v338
  %v340 = vld [vmem:[%s4 + $0x8] sm:$0xff]
  %v341 = vsel %vm336, %v295, %v340
  %342 = vst [vmem:[%s4 + $0x8] sm:$0xff] %v341
  %vm343 = vcmask 387074
  %vm344 = vmand %vm343, %vm314
  %vm345 = vmor %vm344, %vm312
  %v346 = vld [vmem:[%s4 + $0x10] sm:$0x7]
  %v347 = vsel %vm345, %v302, %v346
  %348 = vst [vmem:[%s4 + $0x10] sm:$0x7] %v347
  // Predicated region
  $region18: #{base_forward.6} parent=0 // pred_check
    _
  $region19: #{base_forward.6} parent=0 // pred_check_branch
    %350 = sbr.rel (0) target = $region21
  $region20: #{base_forward.6} parent=0 // pred_region
    _
  $region21: #{base_forward.6} parent=0 // pred_fallthru
    _
  // Predicated region
  $region22: #{base_forward.6} parent=0 // pred_check
    _
  $region23: #{base_forward.6} parent=0 // pred_check_branch
    %352 = sbr.rel (0) target = $region25
  $region24: #{base_forward.6} parent=0 // pred_region
    _
  $region25: #{base_forward.6} parent=0 // pred_fallthru
    _

// kernel: base_forward.7
$region0: #{base_forward.7}
  #allocation0 [shape = 'u32[]', space=smem, size = 0x4, offset = 0x4, fixed_abs, tag = 'smem constant byte address 0x4 - core index']
  #allocation1 [shape = 'u32[72,128]{1,0:T(1,128)}', space=vmem, size = 0x9000, scoped, tag = 'internal scratch']
  %s0 = inlined_call_operand.vmem [shape: bf16[16,150], index: 0, kind: input, shape index: {}]
  %s1 = inlined_call_operand.vmem [shape: bf16[150,200], index: 1, kind: input, shape index: {}]
  %s2 = inlined_call_operand.vmem [shape: f32[16,1], index: 2, kind: input, shape index: {}]
  %s3 = inlined_call_operand.vmem [shape: bf16[16,200], index: 3, kind: output, shape index: {}]
  %s4 = sld [smem:[#allocation0]]
  $region22: #{base_forward.7} parent=0
    _
  %s6 = ssub.s32 1, %s4
  %s7 = scalar_select 0, %s6, %s4
  // Predicated region
  $region2: #{base_forward.7} parent=0 // pred_check
    _
  $region3: #{base_forward.7} parent=0 // pred_check_branch
    %9 = sbr.rel (0) target = $region5
  $region4: #{base_forward.7} parent=0 // pred_region
    _
  $region5: #{base_forward.7} parent=0 // pred_fallthru
    _
  // Predicated region
  $region6: #{base_forward.7} parent=0 // pred_check
    _
  $region7: #{base_forward.7} parent=0 // pred_check_branch
    %11 = sbr.rel (0) target = $region9
  $region8: #{base_forward.7} parent=0 // pred_region
    _
  $region9: #{base_forward.7} parent=0 // pred_fallthru
    _
  // Predicated region
  $region10: #{base_forward.7} parent=0 // pred_check
    _
  $region11: #{base_forward.7} parent=0 // pred_check_branch
    %13 = sbr.rel (0) target = $region13
  $region12: #{base_forward.7} parent=0 // pred_region
    _
  $region13: #{base_forward.7} parent=0 // pred_fallthru
    _
  %v15 = vld [vmem:[%s0] sm:$0xff]
  %v16 = vld [vmem:[%s0 + $0x8] sm:$0xff]
  %v17 = vld [vmem:[%s1] sm:$0xff]
  %v18 = vld [vmem:[%s1 + $0x8] sm:$0xff]
  %v19 = vld [vmem:[%s1 + $0x10] sm:$0xff]
  %v20 = vld [vmem:[%s1 + $0x18] sm:$0xff]
  %v21 = vld [vmem:[%s1 + $0x20] sm:$0xff]
  %v22 = vld [vmem:[%s1 + $0x28] sm:$0xff]
  %v23 = vld [vmem:[%s1 + $0x30] sm:$0xff]
  %v24 = vld [vmem:[%s1 + $0x38] sm:$0xff]
  %v25 = vld [vmem:[%s1 + $0x40] sm:$0xff]
  %v26 = vld [vmem:[%s1 + $0x48] sm:$0xff]
  %v27 = vld [vmem:[%s1 + $0x50] sm:$0xff]
  %v28 = vld [vmem:[%s1 + $0x58] sm:$0xff]
  %v29 = vld [vmem:[%s1 + $0x60] sm:$0xff]
  %v30 = vld [vmem:[%s1 + $0x68] sm:$0xff]
  %v31 = vld [vmem:[%s1 + $0x70] sm:$0xff]
  %v32 = vld [vmem:[%s1 + $0x78] sm:$0xff]
  %v33 = vld [vmem:[%s1 + $0x80] sm:$0xff]
  %v34 = vld [vmem:[%s1 + $0x88] sm:$0xff]
  %v35 = vld [vmem:[%s1 + $0x90] sm:$0x77]
  %v36 = vld [vmem:[%s2] sm:$0xff]
  %v37 = vld [vmem:[%s2 + $0x8] sm:$0xff]
  %39 = vset.pattern.permute.xlu0 0
  %40 = vperm.xlu0 %39, %v36
  %v41 = vpop.permute.xlu0 %40
  %44 = vset.pattern.permute.xlu0 0
  %45 = vperm.xlu0 %44, %v37
  %v46 = vpop.permute.xlu0 %45
  %v50 = vunpack.c.l.b16 %v15
  %v51 = vunpack.c.h.b16 %v15
  %v52 = vunpack.c.l.b16 %v16
  %v53 = vunpack.c.h.b16 %v16
  %v54 = vpack.c.b16 %v52, %v50
  %v55 = vpack.c.b16 %v53, %v51
  %v76 = vunpack.c.l.b16 %v17
  %v77 = vunpack.c.h.b16 %v17
  %v78 = vunpack.c.l.b16 %v18
  %v79 = vunpack.c.h.b16 %v18
  %v80 = vunpack.c.l.b16 %v19
  %v81 = vunpack.c.h.b16 %v19
  %v82 = vunpack.c.l.b16 %v20
  %v83 = vunpack.c.h.b16 %v20
  %v84 = vunpack.c.l.b16 %v21
  %v85 = vunpack.c.h.b16 %v21
  %v86 = vunpack.c.l.b16 %v22
  %v87 = vunpack.c.h.b16 %v22
  %v88 = vunpack.c.l.b16 %v23
  %v89 = vunpack.c.h.b16 %v23
  %v90 = vunpack.c.l.b16 %v24
  %v91 = vunpack.c.h.b16 %v24
  %v92 = vunpack.c.l.b16 %v25
  %v93 = vunpack.c.h.b16 %v25
  %v94 = vunpack.c.l.b16 %v26
  %v95 = vunpack.c.h.b16 %v26
  %v96 = vunpack.c.l.b16 %v27
  %v97 = vunpack.c.h.b16 %v27
  %v98 = vunpack.c.l.b16 %v28
  %v99 = vunpack.c.h.b16 %v28
  %v100 = vunpack.c.l.b16 %v29
  %v101 = vunpack.c.h.b16 %v29
  %v102 = vunpack.c.l.b16 %v30
  %v103 = vunpack.c.h.b16 %v30
  %v104 = vunpack.c.l.b16 %v31
  %v105 = vunpack.c.h.b16 %v31
  %v106 = vunpack.c.l.b16 %v32
  %v107 = vunpack.c.h.b16 %v32
  %v108 = vunpack.c.l.b16 %v33
  %v109 = vunpack.c.h.b16 %v33
  %v110 = vunpack.c.l.b16 %v34
  %v111 = vunpack.c.h.b16 %v34
  %v112 = vunpack.c.l.b16 %v35
  %v113 = vunpack.c.h.b16 %v35
  %v114 = vpack.c.b16 %v78, %v76
  %v115 = vpack.c.b16 %v79, %v77
  %v116 = vpack.c.b16 %v82, %v80
  %v117 = vpack.c.b16 %v83, %v81
  %v118 = vpack.c.b16 %v86, %v84
  %v119 = vpack.c.b16 %v87, %v85
  %v120 = vpack.c.b16 %v90, %v88
  %v121 = vpack.c.b16 %v91, %v89
  %v122 = vpack.c.b16 %v94, %v92
  %v123 = vpack.c.b16 %v95, %v93
  %v124 = vpack.c.b16 %v98, %v96
  %v125 = vpack.c.b16 %v99, %v97
  %v126 = vpack.c.b16 %v102, %v100
  %v127 = vpack.c.b16 %v103, %v101
  %v128 = vpack.c.b16 %v106, %v104
  %v129 = vpack.c.b16 %v107, %v105
  %v130 = vpack.c.b16 %v110, %v108
  %v131 = vpack.c.b16 %v111, %v109
  %v132 = vpack.c.b16 %v112, %v112
  %v133 = vpack.c.b16 %v113, %v113
  %vm152 = vcmask 179200
  %v154 = vsel %vm152, %v55, 0
  %vm156 = vcmask 1042432
  %v158 = vsel %vm156, %v132, 0
  %v161 = vsel %vm156, %v133, 0
  %163 = vmatpush.bf16.msra.mxu0 %v128
  %164 = vmatpush.bf16.msra.mxu0 %v126
  %165 = vmatpush.bf16.msra.mxu0 %v124
  %166 = vmatpush.bf16.msra.mxu0 %v122
  %167 = vmatpush.bf16.msra.mxu0 %v120
  %168 = vmatpush.bf16.msra.mxu0 %v118
  %169 = vmatpush.bf16.msra.mxu0 %v116
  %170 = vmatpush.bf16.msra.mxu0 %v114
  %171 = vmatmul.bf16.gmra.mxu0 %v54
  %v172 = vpop.f32.mrf.mxu0
  %v173 = vadd.f32 %v41, %v172
  %v174 = vpop.f32.mrf.mxu0
  %v175 = vadd.f32 %v46, %v174
  %176 = vdwg.mxu0
  %177 = vmatpush.bf16.msra.mxu0 0
  %178 = vmatpush.bf16.msra.mxu0 0
  %179 = vmatpush.bf16.msra.mxu0 0
  %180 = vmatpush.bf16.msra.mxu0 0
  %181 = vmatpush.bf16.msra.mxu0 0
  %182 = vmatpush.bf16.msra.mxu0 0
  %183 = vmatpush.bf16.msra.mxu0 %v158
  %184 = vmatpush.bf16.msra.mxu0 %v130
  %185 = vmatmul.bf16.gmra.mxu0 %v154
  %v186 = vpop.f32.mrf.mxu0
  %v187 = vadd.f32 %v173, %v186
  %v188 = vpop.f32.mrf.mxu0
  %v189 = vadd.f32 %v175, %v188
  %190 = vdwg.mxu0
  %191 = vmatpush.bf16.msra.mxu0 %v129
  %192 = vmatpush.bf16.msra.mxu0 %v127
  %193 = vmatpush.bf16.msra.mxu0 %v125
  %194 = vmatpush.bf16.msra.mxu0 %v123
  %195 = vmatpush.bf16.msra.mxu0 %v121
  %196 = vmatpush.bf16.msra.mxu0 %v119
  %197 = vmatpush.bf16.msra.mxu0 %v117
  %198 = vmatpush.bf16.msra.mxu0 %v115
  %199 = vmatmul.bf16.gmra.mxu0 %v54
  %v200 = vpop.f32.mrf.mxu0
  %v201 = vadd.f32 %v41, %v200
  %v202 = vpop.f32.mrf.mxu0
  %v203 = vadd.f32 %v46, %v202
  %204 = vdwg.mxu0
  %205 = vmatpush.bf16.msra.mxu0 0
  %206 = vmatpush.bf16.msra.mxu0 0
  %207 = vmatpush.bf16.msra.mxu0 0
  %208 = vmatpush.bf16.msra.mxu0 0
  %209 = vmatpush.bf16.msra.mxu0 0
  %210 = vmatpush.bf16.msra.mxu0 0
  %211 = vmatpush.bf16.msra.mxu0 %v161
  %212 = vmatpush.bf16.msra.mxu0 %v131
  %213 = vmatmul.bf16.gmra.mxu0 %v154
  %v214 = vpop.f32.mrf.mxu0
  %v215 = vadd.f32 %v201, %v214
  %v216 = vpop.f32.mrf.mxu0
  %v217 = vadd.f32 %v203, %v216
  %218 = vdwg.mxu0
  %v219 = vmax.f32 %v187, 0.0
  %v220 = vmax.f32 %v215, 0.0
  %v221 = vmax.f32 %v189, 0.0
  %v222 = vmax.f32 %v217, 0.0
  %v223 = vpack.c.bf16 %v220, %v219
  %v224 = vpack.c.bf16 %v222, %v221
  %vm225 = vcmask 1043456
  %vm226 = vcmask 588804
  %vm227 = vmor %vm226, %vm225
  %228 = vst.msk [vmem:[%s3] sm:$0xff] %vm227, %v223
  %229 = vst.msk [vmem:[%s3 + $0x8] sm:$0xff] %vm227, %v224
  // Predicated region
  $region14: #{base_forward.7} parent=0 // pred_check
    _
  $region15: #{base_forward.7} parent=0 // pred_check_branch
    %231 = sbr.rel (0) target = $region17
  $region16: #{base_forward.7} parent=0 // pred_region
    _
  $region17: #{base_forward.7} parent=0 // pred_fallthru
    _
  // Predicated region
  $region18: #{base_forward.7} parent=0 // pred_check
    _
  $region19: #{base_forward.7} parent=0 // pred_check_branch
    %233 = sbr.rel (0) target = $region21
  $region20: #{base_forward.7} parent=0 // pred_region
    _
  $region21: #{base_forward.7} parent=0 // pred_fallthru
    _

// kernel: base_forward.8
$region0: #{base_forward.8}
  #allocation0 [shape = 'u32[]', space=smem, size = 0x4, offset = 0x4, fixed_abs, tag = 'smem constant byte address 0x4 - core index']
  #allocation1 [shape = 'u32[72,128]{1,0:T(1,128)}', space=vmem, size = 0x9000, scoped, tag = 'internal scratch']
  %s0 = inlined_call_operand.vmem [shape: bf16[1,800], index: 0, kind: input, shape index: {}]
  %s1 = inlined_call_operand.vmem [shape: bf16[1,800], index: 1, kind: input, shape index: {}]
  %s2 = inlined_call_operand.vmem [shape: bf16[1,800], index: 2, kind: input, shape index: {}]
  %s3 = inlined_call_operand.vmem [shape: bf16[1,800], index: 3, kind: input, shape index: {}]
  %s4 = inlined_call_operand.vmem [shape: bf16[1,800], index: 4, kind: output, shape index: {}]
  %s5 = sld [smem:[#allocation0]]
  $region26: #{base_forward.8} parent=0
    _
  %s7 = ssub.s32 1, %s5
  %s8 = scalar_select 0, %s7, %s5
  // Predicated region
  $region2: #{base_forward.8} parent=0 // pred_check
    _
  $region3: #{base_forward.8} parent=0 // pred_check_branch
    %10 = sbr.rel (0) target = $region5
  $region4: #{base_forward.8} parent=0 // pred_region
    _
  $region5: #{base_forward.8} parent=0 // pred_fallthru
    _
  // Predicated region
  $region6: #{base_forward.8} parent=0 // pred_check
    _
  $region7: #{base_forward.8} parent=0 // pred_check_branch
    %12 = sbr.rel (0) target = $region9
  $region8: #{base_forward.8} parent=0 // pred_region
    _
  $region9: #{base_forward.8} parent=0 // pred_fallthru
    _
  // Predicated region
  $region10: #{base_forward.8} parent=0 // pred_check
    _
  $region11: #{base_forward.8} parent=0 // pred_check_branch
    %14 = sbr.rel (0) target = $region13
  $region12: #{base_forward.8} parent=0 // pred_region
    _
  $region13: #{base_forward.8} parent=0 // pred_fallthru
    _
  // Predicated region
  $region14: #{base_forward.8} parent=0 // pred_check
    _
  $region15: #{base_forward.8} parent=0 // pred_check_branch
    %16 = sbr.rel (0) target = $region17
  $region16: #{base_forward.8} parent=0 // pred_region
    _
  $region17: #{base_forward.8} parent=0 // pred_fallthru
    _
  %v17 = vld [vmem:[%s0] sm:$0x7f]
  %v18 = vld [vmem:[%s1] sm:$0x7f]
  %v19 = vunpack.c.l.bf16 %v17
  %v20 = vunpack.c.h.bf16 %v17
  %v21 = vunpack.c.l.bf16 %v18
  %v22 = vunpack.c.h.bf16 %v18
  %v23 = vmax.f32 %v19, %v21
  %v24 = vmax.f32 %v20, %v22
  %v27 = vperm.slane %v23, 0
  %v28 = vperm.slane %v23, 2
  %v29 = vperm.slane %v23, 4
  %v30 = vperm.slane %v23, 6
  %v31 = vperm.slane %v24, 0
  %v32 = vperm.slane %v24, 2
  %v33 = vperm.slane %v24, 4
  %v41 = vpack.c.bf16 %v28, %v27
  %v42 = vpack.c.bf16 %v30, %v29
  %v43 = vpack.c.bf16 %v32, %v31
  %v44 = vpack.c.bf16 %v33, %v33
  %v45 = vld [vmem:[%s2] sm:$0x7f]
  %v46 = vld [vmem:[%s3] sm:$0x7f]
  %v47 = vunpack.c.l.bf16 %v45
  %v48 = vunpack.c.h.bf16 %v45
  %v49 = vunpack.c.l.bf16 %v46
  %v50 = vunpack.c.h.bf16 %v46
  %v51 = vmax.f32 %v47, %v49
  %v52 = vmax.f32 %v48, %v50
  %v55 = vperm.slane %v51, 0
  %v56 = vperm.slane %v51, 2
  %v57 = vperm.slane %v51, 4
  %v58 = vperm.slane %v51, 6
  %v59 = vperm.slane %v52, 0
  %v60 = vperm.slane %v52, 2
  %v61 = vperm.slane %v52, 4
  %v69 = vpack.c.bf16 %v56, %v55
  %v70 = vpack.c.bf16 %v58, %v57
  %v71 = vpack.c.bf16 %v60, %v59
  %v72 = vpack.c.bf16 %v61, %v61
  %v73 = vunpack.c.l.bf16 %v41
  %v74 = vunpack.c.h.bf16 %v41
  %v75 = vunpack.c.l.bf16 %v42
  %v76 = vunpack.c.h.bf16 %v42
  %v77 = vunpack.c.l.bf16 %v43
  %v78 = vunpack.c.h.bf16 %v43
  %v79 = vunpack.c.l.bf16 %v44
  %v80 = vunpack.c.l.bf16 %v69
  %v81 = vunpack.c.h.bf16 %v69
  %v82 = vunpack.c.l.bf16 %v70
  %v83 = vunpack.c.h.bf16 %v70
  %v84 = vunpack.c.l.bf16 %v71
  %v85 = vunpack.c.h.bf16 %v71
  %v86 = vunpack.c.l.bf16 %v72
  %v87 = vmax.f32 %v73, %v80
  %v88 = vmax.f32 %v74, %v81
  %v89 = vmax.f32 %v75, %v82
  %v90 = vmax.f32 %v76, %v83
  %v91 = vmax.f32 %v77, %v84
  %v92 = vmax.f32 %v78, %v85
  %v93 = vmax.f32 %v79, %v86
  %v94 = vpack.c.bf16 %v88, %v87
  %v95 = vpack.c.bf16 %v90, %v89
  %v96 = vpack.c.bf16 %v92, %v91
  %v97 = vpack.c.bf16 %v93, %v93
  %v102 = vrot.slane %v94, 3
  %v103 = vrot.slane %v95, 6
  %v104 = vrot.slane %v95, 1
  %v105 = vrot.slane %v96, 4
  %v106 = vrot.slane %v96, 7
  %v107 = vrot.slane %v97, 2
  %v108 = vrot.slane %v97, 5
  %vm109 = vcmask 1040384
  %v112 = vsel %vm109, %v94, %v102
  %vm113 = vcmask 1042434
  %v116 = vsel %vm113, %v103, %v104
  %vm117 = vcmask 1041408
  %v118 = vsel %vm117, %v112, %v116
  %vm119 = vcmask 1044484
  %v122 = vsel %vm119, %v105, %v106
  %vm123 = vcmask 1046534
  %v126 = vsel %vm123, %v107, %v108
  %vm127 = vcmask 1045508
  %v128 = vsel %vm127, %v122, %v126
  %vm129 = vcmask 1043456
  %v130 = vsel %vm129, %v118, %v128
  %vm132 = vcmask 1040384
  %vm133 = vsmask.f32 256
  %vm134 = vmand %vm132, %vm133
  %vm135 = vcmask 1041409
  %vm136 = vsmask.f32 1280
  %vm137 = vmand %vm135, %vm136
  %vm138 = vmor %vm137, %vm134
  %vm139 = vcmask 1042434
  %vm140 = vsmask.f32 2304
  %vm141 = vmand %vm139, %vm140
  %vm142 = vmor %vm141, %vm138
  %vm143 = vcmask 1043459
  %vm144 = vsmask.f32 3328
  %vm145 = vmand %vm143, %vm144
  %vm146 = vmor %vm145, %vm142
  %vm147 = vcmask 1044484
  %vm148 = vsmask.f32 4352
  %vm149 = vmand %vm147, %vm148
  %vm150 = vmor %vm149, %vm146
  %vm151 = vcmask 1045509
  %vm152 = vsmask.f32 5376
  %vm153 = vmand %vm151, %vm152
  %vm154 = vmor %vm153, %vm150
  %vm155 = vcmask 260102
  %vm156 = vsmask.f32 6400
  %vm157 = vmand %vm155, %vm156
  %vm158 = vmor %vm157, %vm154
  %v159 = vld [vmem:[%s4] sm:$0x7f]
  %v160 = vsel %vm158, %v130, %v159
  %161 = vst [vmem:[%s4] sm:$0x7f] %v160
  // Predicated region
  $region18: #{base_forward.8} parent=0 // pred_check
    _
  $region19: #{base_forward.8} parent=0 // pred_check_branch
    %163 = sbr.rel (0) target = $region21
  $region20: #{base_forward.8} parent=0 // pred_region
    _
  $region21: #{base_forward.8} parent=0 // pred_fallthru
    _
  // Predicated region
  $region22: #{base_forward.8} parent=0 // pred_check
    _
  $region23: #{base_forward.8} parent=0 // pred_check_branch
    %165 = sbr.rel (0) target = $region25
  $region24: #{base_forward.8} parent=0 // pred_region
    _
  $region25: #{base_forward.8} parent=0 // pred_fallthru
    _

// kernel: base_forward.9
$region0: #{base_forward.9}
  #allocation0 [shape = 'u32[]', space=smem, size = 0x4, offset = 0x4, fixed_abs, tag = 'smem constant byte address 0x4 - core index']
  #allocation1 [shape = 'u32[72,128]{1,0:T(1,128)}', space=vmem, size = 0x9000, scoped, tag = 'internal scratch']
  %s0 = inlined_call_operand.vmem [shape: bf16[2,400], index: 0, kind: input, shape index: {}]
  %s1 = inlined_call_operand.vmem [shape: bf16[400,150], index: 1, kind: input, shape index: {}]
  %s2 = inlined_call_operand.vmem [shape: f32[1,150], index: 2, kind: input, shape index: {}]
  %s3 = inlined_call_operand.vmem [shape: bf16[150,84], index: 3, kind: input, shape index: {}]
  %s4 = inlined_call_operand.vmem [shape: f32[1,84], index: 4, kind: input, shape index: {}]
  %s5 = inlined_call_operand.vmem [shape: bf16[84,10], index: 5, kind: input, shape index: {}]
  %s6 = inlined_call_operand.vmem [shape: f32[1,10], index: 6, kind: input, shape index: {}]
  %s7 = inlined_call_operand.hbm [shape: f32[2,10], index: 7, kind: output, shape index: {}]
  %s8 = sld [smem:[#allocation0]]
  $region38: #{base_forward.9} parent=0
    _
  %s10 = ssub.s32 1, %s8
  %s11 = scalar_select 0, %s10, %s8
  $region1: #{base_forward.9} parent=0
    #allocation2 [shape = 'u8[1024]{0}', space=vmem, size = 0x400, scoped, tag = 'output window, operand 0, single buffered']
    #allocation3 [shape = 's32[1]{0}', space=sflag, size = 0x4, scoped, tag = 'scoped memory for base_forward.9']
    %12 = vsyncpa [#allocation3], 0
    // Predicated region
    $region2: #{base_forward.9} parent=1 // pred_check
      _
    $region3: #{base_forward.9} parent=1 // pred_check_branch
      %14 = sbr.rel (0) target = $region5
    $region4: #{base_forward.9} parent=1 // pred_region
      _
    $region5: #{base_forward.9} parent=1 // pred_fallthru
      _
    // Predicated region
    $region6: #{base_forward.9} parent=1 // pred_check
      _
    $region7: #{base_forward.9} parent=1 // pred_check_branch
      %16 = sbr.rel (0) target = $region9
    $region8: #{base_forward.9} parent=1 // pred_region
      _
    $region9: #{base_forward.9} parent=1 // pred_fallthru
      _
    // Predicated region
    $region10: #{base_forward.9} parent=1 // pred_check
      _
    $region11: #{base_forward.9} parent=1 // pred_check_branch
      %18 = sbr.rel (0) target = $region13
    $region12: #{base_forward.9} parent=1 // pred_region
      _
    $region13: #{base_forward.9} parent=1 // pred_fallthru
      _
    // Predicated region
    $region14: #{base_forward.9} parent=1 // pred_check
      _
    $region15: #{base_forward.9} parent=1 // pred_check_branch
      %20 = sbr.rel (0) target = $region17
    $region16: #{base_forward.9} parent=1 // pred_region
      _
    $region17: #{base_forward.9} parent=1 // pred_fallthru
      _
    // Predicated region
    $region18: #{base_forward.9} parent=1 // pred_check
      _
    $region19: #{base_forward.9} parent=1 // pred_check_branch
      %22 = sbr.rel (0) target = $region21
    $region20: #{base_forward.9} parent=1 // pred_region
      _
    $region21: #{base_forward.9} parent=1 // pred_fallthru
      _
    // Predicated region
    $region22: #{base_forward.9} parent=1 // pred_check
      _
    $region23: #{base_forward.9} parent=1 // pred_check_branch
      %24 = sbr.rel (0) target = $region25
    $region24: #{base_forward.9} parent=1 // pred_region
      _
    $region25: #{base_forward.9} parent=1 // pred_fallthru
      _
    // Predicated region
    $region26: #{base_forward.9} parent=1 // pred_check
      _
    $region27: #{base_forward.9} parent=1 // pred_check_branch
      %26 = sbr.rel (0) target = $region29
    $region28: #{base_forward.9} parent=1 // pred_region
      _
    $region29: #{base_forward.9} parent=1 // pred_fallthru
      _
    %v28 = vld [vmem:[%s0] sm:$0xf]
    %v29 = vld [vmem:[%s1] sm:$0xff]
    %v30 = vld [vmem:[%s1 + $0x8] sm:$0xff]
    %v31 = vld [vmem:[%s1 + $0x10] sm:$0xff]
    %v32 = vld [vmem:[%s1 + $0x18] sm:$0xff]
    %v33 = vld [vmem:[%s1 + $0x20] sm:$0xff]
    %v34 = vld [vmem:[%s1 + $0x28] sm:$0xff]
    %v35 = vld [vmem:[%s1 + $0x30] sm:$0xff]
    %v36 = vld [vmem:[%s1 + $0x38] sm:$0xff]
    %v37 = vld [vmem:[%s1 + $0x40] sm:$0xff]
    %v38 = vld [vmem:[%s1 + $0x48] sm:$0xff]
    %v39 = vld [vmem:[%s1 + $0x50] sm:$0xff]
    %v40 = vld [vmem:[%s1 + $0x58] sm:$0xff]
    %v41 = vld [vmem:[%s1 + $0x60] sm:$0xff]
    %v42 = vld [vmem:[%s1 + $0x68] sm:$0xff]
    %v43 = vld [vmem:[%s1 + $0x70] sm:$0xff]
    %v44 = vld [vmem:[%s1 + $0x78] sm:$0xff]
    %v45 = vld [vmem:[%s1 + $0x80] sm:$0xff]
    %v46 = vld [vmem:[%s1 + $0x88] sm:$0xff]
    %v47 = vld [vmem:[%s1 + $0x90] sm:$0xff]
    %v48 = vld [vmem:[%s1 + $0x98] sm:$0xff]
    %v49 = vld [vmem:[%s1 + $0xa0] sm:$0xff]
    %v50 = vld [vmem:[%s1 + $0xa8] sm:$0xff]
    %v51 = vld [vmem:[%s1 + $0xb0] sm:$0xff]
    %v52 = vld [vmem:[%s1 + $0xb8] sm:$0xff]
    %v53 = vld [vmem:[%s1 + $0xc0] sm:$0xff]
    %v54 = vld [vmem:[%s1 + $0xc8] sm:$0xff]
    %v55 = vld [vmem:[%s1 + $0xd0] sm:$0xff]
    %v56 = vld [vmem:[%s1 + $0xd8] sm:$0xff]
    %v57 = vld [vmem:[%s1 + $0xe0] sm:$0xff]
    %v58 = vld [vmem:[%s1 + $0xe8] sm:$0xff]
    %v59 = vld [vmem:[%s1 + $0xf0] sm:$0xff]
    %v60 = vld [vmem:[%s1 + $0xf8] sm:$0xff]
    %v61 = vld [vmem:[%s1 + $0x100] sm:$0xff]
    %v62 = vld [vmem:[%s1 + $0x108] sm:$0xff]
    %v63 = vld [vmem:[%s1 + $0x110] sm:$0xff]
    %v64 = vld [vmem:[%s1 + $0x118] sm:$0xff]
    %v65 = vld [vmem:[%s1 + $0x120] sm:$0xff]
    %v66 = vld [vmem:[%s1 + $0x128] sm:$0xff]
    %v67 = vld [vmem:[%s1 + $0x130] sm:$0xff]
    %v68 = vld [vmem:[%s1 + $0x138] sm:$0xff]
    %v69 = vld [vmem:[%s1 + $0x140] sm:$0xff]
    %v70 = vld [vmem:[%s1 + $0x148] sm:$0xff]
    %v71 = vld [vmem:[%s1 + $0x150] sm:$0xff]
    %v72 = vld [vmem:[%s1 + $0x158] sm:$0xff]
    %v73 = vld [vmem:[%s1 + $0x160] sm:$0xff]
    %v74 = vld [vmem:[%s1 + $0x168] sm:$0xff]
    %v75 = vld [vmem:[%s1 + $0x170] sm:$0xff]
    %v76 = vld [vmem:[%s1 + $0x178] sm:$0xff]
    %v77 = vld [vmem:[%s1 + $0x180] sm:$0xff]
    %v78 = vld [vmem:[%s1 + $0x188] sm:$0xff]
    %v79 = vld [vmem:[%s2] sm:$0x3]
    %v81 = vperm.slane %v79, 0
    %v82 = vperm.slane %v79, 1
    %86 = vst [vmem:[#allocation1] ss:$9 sm:$0xff] %v28
    %v87 = vld [vmem:[#allocation1] sm:$0xff]
    %v88 = vld [vmem:[#allocation1 + $0x9] sm:$0xff]
    %v89 = vld [vmem:[#allocation1 + $0x12] sm:$0xff]
    %v90 = vld [vmem:[#allocation1 + $0x1b] sm:$0xff]
    %v144 = vunpack.c.l.b16 %v29
    %v145 = vunpack.c.h.b16 %v29
    %v146 = vunpack.c.l.b16 %v30
    %v147 = vunpack.c.h.b16 %v30
    %v148 = vunpack.c.l.b16 %v31
    %v149 = vunpack.c.h.b16 %v31
    %v150 = vunpack.c.l.b16 %v32
    %v151 = vunpack.c.h.b16 %v32
    %v152 = vunpack.c.l.b16 %v33
    %v153 = vunpack.c.h.b16 %v33
    %v154 = vunpack.c.l.b16 %v34
    %v155 = vunpack.c.h.b16 %v34
    %v156 = vunpack.c.l.b16 %v35
    %v157 = vunpack.c.h.b16 %v35
    %v158 = vunpack.c.l.b16 %v36
    %v159 = vunpack.c.h.b16 %v36
    %v160 = vunpack.c.l.b16 %v37
    %v161 = vunpack.c.h.b16 %v37
    %v162 = vunpack.c.l.b16 %v38
    %v163 = vunpack.c.h.b16 %v38
    %v164 = vunpack.c.l.b16 %v39
    %v165 = vunpack.c.h.b16 %v39
    %v166 = vunpack.c.l.b16 %v40
    %v167 = vunpack.c.h.b16 %v40
    %v168 = vunpack.c.l.b16 %v41
    %v169 = vunpack.c.h.b16 %v41
    %v170 = vunpack.c.l.b16 %v42
    %v171 = vunpack.c.h.b16 %v42
    %v172 = vunpack.c.l.b16 %v43
    %v173 = vunpack.c.h.b16 %v43
    %v174 = vunpack.c.l.b16 %v44
    %v175 = vunpack.c.h.b16 %v44
    %v176 = vunpack.c.l.b16 %v45
    %v177 = vunpack.c.h.b16 %v45
    %v178 = vunpack.c.l.b16 %v46
    %v179 = vunpack.c.h.b16 %v46
    %v180 = vunpack.c.l.b16 %v47
    %v181 = vunpack.c.h.b16 %v47
    %v182 = vunpack.c.l.b16 %v48
    %v183 = vunpack.c.h.b16 %v48
    %v184 = vunpack.c.l.b16 %v49
    %v185 = vunpack.c.h.b16 %v49
    %v186 = vunpack.c.l.b16 %v50
    %v187 = vunpack.c.h.b16 %v50
    %v188 = vunpack.c.l.b16 %v51
    %v189 = vunpack.c.h.b16 %v51
    %v190 = vunpack.c.l.b16 %v52
    %v191 = vunpack.c.h.b16 %v52
    %v192 = vunpack.c.l.b16 %v53
    %v193 = vunpack.c.h.b16 %v53
    %v194 = vunpack.c.l.b16 %v54
    %v195 = vunpack.c.h.b16 %v54
    %v196 = vunpack.c.l.b16 %v55
    %v197 = vunpack.c.h.b16 %v55
    %v198 = vunpack.c.l.b16 %v56
    %v199 = vunpack.c.h.b16 %v56
    %v200 = vunpack.c.l.b16 %v57
    %v201 = vunpack.c.h.b16 %v57
    %v202 = vunpack.c.l.b16 %v58
    %v203 = vunpack.c.h.b16 %v58
    %v204 = vunpack.c.l.b16 %v59
    %v205 = vunpack.c.h.b16 %v59
    %v206 = vunpack.c.l.b16 %v60
    %v207 = vunpack.c.h.b16 %v60
    %v208 = vunpack.c.l.b16 %v61
    %v209 = vunpack.c.h.b16 %v61
    %v210 = vunpack.c.l.b16 %v62
    %v211 = vunpack.c.h.b16 %v62
    %v212 = vunpack.c.l.b16 %v63
    %v213 = vunpack.c.h.b16 %v63
    %v214 = vunpack.c.l.b16 %v64
    %v215 = vunpack.c.h.b16 %v64
    %v216 = vunpack.c.l.b16 %v65
    %v217 = vunpack.c.h.b16 %v65
    %v218 = vunpack.c.l.b16 %v66
    %v219 = vunpack.c.h.b16 %v66
    %v220 = vunpack.c.l.b16 %v67
    %v221 = vunpack.c.h.b16 %v67
    %v222 = vunpack.c.l.b16 %v68
    %v223 = vunpack.c.h.b16 %v68
    %v224 = vunpack.c.l.b16 %v69
    %v225 = vunpack.c.h.b16 %v69
    %v226 = vunpack.c.l.b16 %v70
    %v227 = vunpack.c.h.b16 %v70
    %v228 = vunpack.c.l.b16 %v71
    %v229 = vunpack.c.h.b16 %v71
    %v230 = vunpack.c.l.b16 %v72
    %v231 = vunpack.c.h.b16 %v72
    %v232 = vunpack.c.l.b16 %v73
    %v233 = vunpack.c.h.b16 %v73
    %v234 = vunpack.c.l.b16 %v74
    %v235 = vunpack.c.h.b16 %v74
    %v236 = vunpack.c.l.b16 %v75
    %v237 = vunpack.c.h.b16 %v75
    %v238 = vunpack.c.l.b16 %v76
    %v239 = vunpack.c.h.b16 %v76
    %v240 = vunpack.c.l.b16 %v77
    %v241 = vunpack.c.h.b16 %v77
    %v242 = vunpack.c.l.b16 %v78
    %v243 = vunpack.c.h.b16 %v78
    %v244 = vpack.c.b16 %v146, %v144
    %v245 = vpack.c.b16 %v147, %v145
    %v246 = vpack.c.b16 %v150, %v148
    %v247 = vpack.c.b16 %v151, %v149
    %v248 = vpack.c.b16 %v154, %v152
    %v249 = vpack.c.b16 %v155, %v153
    %v250 = vpack.c.b16 %v158, %v156
    %v251 = vpack.c.b16 %v159, %v157
    %v252 = vpack.c.b16 %v162, %v160
    %v253 = vpack.c.b16 %v163, %v161
    %v254 = vpack.c.b16 %v166, %v164
    %v255 = vpack.c.b16 %v167, %v165
    %v256 = vpack.c.b16 %v170, %v168
    %v257 = vpack.c.b16 %v171, %v169
    %v258 = vpack.c.b16 %v174, %v172
    %v259 = vpack.c.b16 %v175, %v173
    %v260 = vpack.c.b16 %v178, %v176
    %v261 = vpack.c.b16 %v179, %v177
    %v262 = vpack.c.b16 %v182, %v180
    %v263 = vpack.c.b16 %v183, %v181
    %v264 = vpack.c.b16 %v186, %v184
    %v265 = vpack.c.b16 %v187, %v185
    %v266 = vpack.c.b16 %v190, %v188
    %v267 = vpack.c.b16 %v191, %v189
    %v268 = vpack.c.b16 %v194, %v192
    %v269 = vpack.c.b16 %v195, %v193
    %v270 = vpack.c.b16 %v198, %v196
    %v271 = vpack.c.b16 %v199, %v197
    %v272 = vpack.c.b16 %v202, %v200
    %v273 = vpack.c.b16 %v203, %v201
    %v274 = vpack.c.b16 %v206, %v204
    %v275 = vpack.c.b16 %v207, %v205
    %v276 = vpack.c.b16 %v210, %v208
    %v277 = vpack.c.b16 %v211, %v209
    %v278 = vpack.c.b16 %v214, %v212
    %v279 = vpack.c.b16 %v215, %v213
    %v280 = vpack.c.b16 %v218, %v216
    %v281 = vpack.c.b16 %v219, %v217
    %v282 = vpack.c.b16 %v222, %v220
    %v283 = vpack.c.b16 %v223, %v221
    %v284 = vpack.c.b16 %v226, %v224
    %v285 = vpack.c.b16 %v227, %v225
    %v286 = vpack.c.b16 %v230, %v228
    %v287 = vpack.c.b16 %v231, %v229
    %v288 = vpack.c.b16 %v234, %v232
    %v289 = vpack.c.b16 %v235, %v233
    %v290 = vpack.c.b16 %v238, %v236
    %v291 = vpack.c.b16 %v239, %v237
    %v292 = vpack.c.b16 %v242, %v240
    %v293 = vpack.c.b16 %v243, %v241
    %vm344 = vcmask 130048
    %v345 = vsel %vm344, %v90, 0
    %347 = vmatpush.bf16.msra.mxu0 %v258
    %348 = vmatpush.bf16.msra.mxu0 %v256
    %349 = vmatpush.bf16.msra.mxu0 %v254
    %350 = vmatpush.bf16.msra.mxu0 %v252
    %351 = vmatpush.bf16.msra.mxu0 %v250
    %352 = vmatpush.bf16.msra.mxu0 %v248
    %353 = vmatpush.bf16.msra.mxu0 %v246
    %354 = vmatpush.bf16.msra.mxu0 %v244
    %355 = vmatmul.bf16.gmra.mxu0 %v87
    %v356 = vpop.f32.mrf.mxu0
    %v357 = vadd.f32 %v81, %v356
    %v358 = vpop.f32.mrf.mxu0
    %359 = vdwg.mxu0
    %360 = vmatpush.bf16.msra.mxu0 %v274
    %361 = vmatpush.bf16.msra.mxu0 %v272
    %362 = vmatpush.bf16.msra.mxu0 %v270
    %363 = vmatpush.bf16.msra.mxu0 %v268
    %364 = vmatpush.bf16.msra.mxu0 %v266
    %365 = vmatpush.bf16.msra.mxu0 %v264
    %366 = vmatpush.bf16.msra.mxu0 %v262
    %367 = vmatpush.bf16.msra.mxu0 %v260
    %368 = vmatmul.bf16.gmra.mxu0 %v88
    %v369 = vpop.f32.mrf.mxu0
    %v370 = vadd.f32 %v357, %v369
    %v371 = vpop.f32.mrf.mxu0
    %372 = vdwg.mxu0
    %373 = vmatpush.bf16.msra.mxu0 %v290
    %374 = vmatpush.bf16.msra.mxu0 %v288
    %375 = vmatpush.bf16.msra.mxu0 %v286
    %376 = vmatpush.bf16.msra.mxu0 %v284
    %377 = vmatpush.bf16.msra.mxu0 %v282
    %378 = vmatpush.bf16.msra.mxu0 %v280
    %379 = vmatpush.bf16.msra.mxu0 %v278
    %380 = vmatpush.bf16.msra.mxu0 %v276
    %381 = vmatmul.bf16.gmra.mxu0 %v89
    %v382 = vpop.f32.mrf.mxu0
    %v383 = vadd.f32 %v370, %v382
    %v384 = vpop.f32.mrf.mxu0
    %385 = vdwg.mxu0
    %386 = vmatpush.bf16.msra.mxu0 0
    %387 = vmatpush.bf16.msra.mxu0 0
    %388 = vmatpush.bf16.msra.mxu0 0
    %389 = vmatpush.bf16.msra.mxu0 0
    %390 = vmatpush.bf16.msra.mxu0 0
    %391 = vmatpush.bf16.msra.mxu0 0
    %392 = vmatpush.bf16.msra.mxu0 0
    %393 = vmatpush.bf16.msra.mxu0 %v292
    %394 = vmatmul.bf16.gmra.mxu0 %v345
    %v395 = vpop.f32.mrf.mxu0
    %v396 = vadd.f32 %v383, %v395
    %v397 = vpop.f32.mrf.mxu0
    %398 = vdwg.mxu0
    %399 = vmatpush.bf16.msra.mxu0 %v259
    %400 = vmatpush.bf16.msra.mxu0 %v257
    %401 = vmatpush.bf16.msra.mxu0 %v255
    %402 = vmatpush.bf16.msra.mxu0 %v253
    %403 = vmatpush.bf16.msra.mxu0 %v251
    %404 = vmatpush.bf16.msra.mxu0 %v249
    %405 = vmatpush.bf16.msra.mxu0 %v247
    %406 = vmatpush.bf16.msra.mxu0 %v245
    %407 = vmatmul.bf16.gmra.mxu0 %v87
    %v408 = vpop.f32.mrf.mxu0
    %v409 = vadd.f32 %v82, %v408
    %v410 = vpop.f32.mrf.mxu0
    %411 = vdwg.mxu0
    %412 = vmatpush.bf16.msra.mxu0 %v275
    %413 = vmatpush.bf16.msra.mxu0 %v273
    %414 = vmatpush.bf16.msra.mxu0 %v271
    %415 = vmatpush.bf16.msra.mxu0 %v269
    %416 = vmatpush.bf16.msra.mxu0 %v267
    %417 = vmatpush.bf16.msra.mxu0 %v265
    %418 = vmatpush.bf16.msra.mxu0 %v263
    %419 = vmatpush.bf16.msra.mxu0 %v261
    %420 = vmatmul.bf16.gmra.mxu0 %v88
    %v421 = vpop.f32.mrf.mxu0
    %v422 = vadd.f32 %v409, %v421
    %v423 = vpop.f32.mrf.mxu0
    %424 = vdwg.mxu0
    %425 = vmatpush.bf16.msra.mxu0 %v291
    %426 = vmatpush.bf16.msra.mxu0 %v289
    %427 = vmatpush.bf16.msra.mxu0 %v287
    %428 = vmatpush.bf16.msra.mxu0 %v285
    %429 = vmatpush.bf16.msra.mxu0 %v283
    %430 = vmatpush.bf16.msra.mxu0 %v281
    %431 = vmatpush.bf16.msra.mxu0 %v279
    %432 = vmatpush.bf16.msra.mxu0 %v277
    %433 = vmatmul.bf16.gmra.mxu0 %v89
    %v434 = vpop.f32.mrf.mxu0
    %v435 = vadd.f32 %v422, %v434
    %v436 = vpop.f32.mrf.mxu0
    %437 = vdwg.mxu0
    %438 = vmatpush.bf16.msra.mxu0 0
    %439 = vmatpush.bf16.msra.mxu0 0
    %440 = vmatpush.bf16.msra.mxu0 0
    %441 = vmatpush.bf16.msra.mxu0 0
    %442 = vmatpush.bf16.msra.mxu0 0
    %443 = vmatpush.bf16.msra.mxu0 0
    %444 = vmatpush.bf16.msra.mxu0 0
    %445 = vmatpush.bf16.msra.mxu0 %v293
    %446 = vmatmul.bf16.gmra.mxu0 %v345
    %v447 = vpop.f32.mrf.mxu0
    %v448 = vadd.f32 %v435, %v447
    %v449 = vpop.f32.mrf.mxu0
    %450 = vdwg.mxu0
    %v451 = vmax.f32 %v396, 0.0
    %v452 = vmax.f32 %v448, 0.0
    %v453 = vpack.c.bf16 %v451, %v451
    %v454 = vpack.c.bf16 %v452, %v452
    %v455 = vld [vmem:[%s3] sm:$0xf]
    %v456 = vld [vmem:[%s3 + $0x4] sm:$0xf]
    %v457 = vld [vmem:[%s3 + $0x8] sm:$0xf]
    %v458 = vld [vmem:[%s3 + $0xc] sm:$0xf]
    %v459 = vld [vmem:[%s3 + $0x10] sm:$0xf]
    %v460 = vld [vmem:[%s3 + $0x14] sm:$0xf]
    %v461 = vld [vmem:[%s3 + $0x18] sm:$0xf]
    %v462 = vld [vmem:[%s3 + $0x1c] sm:$0xf]
    %v463 = vld [vmem:[%s3 + $0x20] sm:$0xf]
    %v464 = vld [vmem:[%s3 + $0x24] sm:$0xf]
    %v465 = vld [vmem:[%s3 + $0x28] sm:$0xf]
    %v466 = vld [vmem:[%s3 + $0x2c] sm:$0xf]
    %v467 = vld [vmem:[%s3 + $0x30] sm:$0xf]
    %v468 = vld [vmem:[%s3 + $0x34] sm:$0xf]
    %v469 = vld [vmem:[%s3 + $0x38] sm:$0xf]
    %v470 = vld [vmem:[%s3 + $0x3c] sm:$0xf]
    %v471 = vld [vmem:[%s3 + $0x40] sm:$0xf]
    %v472 = vld [vmem:[%s3 + $0x44] sm:$0xf]
    %v473 = vld [vmem:[%s3 + $0x48] sm:$0x7]
    %v474 = vld [vmem:[%s4] sm:$0x1]
    %v476 = vperm.slane %v474, 0
    %v497 = vunpack.c.l.b16 %v455
    %v498 = vunpack.c.l.b16 %v456
    %v499 = vunpack.c.l.b16 %v457
    %v500 = vunpack.c.l.b16 %v458
    %v501 = vunpack.c.l.b16 %v459
    %v502 = vunpack.c.l.b16 %v460
    %v503 = vunpack.c.l.b16 %v461
    %v504 = vunpack.c.l.b16 %v462
    %v505 = vunpack.c.l.b16 %v463
    %v506 = vunpack.c.l.b16 %v464
    %v507 = vunpack.c.l.b16 %v465
    %v508 = vunpack.c.l.b16 %v466
    %v509 = vunpack.c.l.b16 %v467
    %v510 = vunpack.c.l.b16 %v468
    %v511 = vunpack.c.l.b16 %v469
    %v512 = vunpack.c.l.b16 %v470
    %v513 = vunpack.c.l.b16 %v471
    %v514 = vunpack.c.l.b16 %v472
    %v515 = vunpack.c.l.b16 %v473
    %v516 = vpack.c.b16 %v498, %v497
    %v517 = vpack.c.b16 %v500, %v499
    %v518 = vpack.c.b16 %v502, %v501
    %v519 = vpack.c.b16 %v504, %v503
    %v520 = vpack.c.b16 %v506, %v505
    %v521 = vpack.c.b16 %v508, %v507
    %v522 = vpack.c.b16 %v510, %v509
    %v523 = vpack.c.b16 %v512, %v511
    %v524 = vpack.c.b16 %v514, %v513
    %v525 = vpack.c.b16 %v515, %v515
    %vm535 = vcmask 179200
    %v537 = vsel %vm535, %v454, 0
    %vm539 = vcmask 1042432
    %v541 = vsel %vm539, %v525, 0
    %543 = vmatpush.bf16.msra.mxu0 %v523
    %544 = vmatpush.bf16.msra.mxu0 %v522
    %545 = vmatpush.bf16.msra.mxu0 %v521
    %546 = vmatpush.bf16.msra.mxu0 %v520
    %547 = vmatpush.bf16.msra.mxu0 %v519
    %548 = vmatpush.bf16.msra.mxu0 %v518
    %549 = vmatpush.bf16.msra.mxu0 %v517
    %550 = vmatpush.bf16.msra.mxu0 %v516
    %551 = vmatmul.bf16.gmra.mxu0 %v453
    %v552 = vpop.f32.mrf.mxu0
    %v553 = vadd.f32 %v476, %v552
    %v554 = vpop.f32.mrf.mxu0
    %555 = vdwg.mxu0
    %556 = vmatpush.bf16.msra.mxu0 0
    %557 = vmatpush.bf16.msra.mxu0 0
    %558 = vmatpush.bf16.msra.mxu0 0
    %559 = vmatpush.bf16.msra.mxu0 0
    %560 = vmatpush.bf16.msra.mxu0 0
    %561 = vmatpush.bf16.msra.mxu0 0
    %562 = vmatpush.bf16.msra.mxu0 %v541
    %563 = vmatpush.bf16.msra.mxu0 %v524
    %564 = vmatmul.bf16.gmra.mxu0 %v537
    %v565 = vpop.f32.mrf.mxu0
    %v566 = vadd.f32 %v553, %v565
    %v567 = vpop.f32.mrf.mxu0
    %568 = vdwg.mxu0
    %v569 = vmax.f32 %v566, 0.0
    %v570 = vpack.c.bf16 %v569, %v569
    %v571 = vld [vmem:[%s5] sm:$0xf]
    %v572 = vld [vmem:[%s5 + $0x4] sm:$0xf]
    %v573 = vld [vmem:[%s5 + $0x8] sm:$0xf]
    %v574 = vld [vmem:[%s5 + $0xc] sm:$0xf]
    %v575 = vld [vmem:[%s5 + $0x10] sm:$0xf]
    %v576 = vld [vmem:[%s5 + $0x14] sm:$0xf]
    %v577 = vld [vmem:[%s5 + $0x18] sm:$0xf]
    %v578 = vld [vmem:[%s5 + $0x1c] sm:$0xf]
    %v579 = vld [vmem:[%s5 + $0x20] sm:$0xf]
    %v580 = vld [vmem:[%s5 + $0x24] sm:$0xf]
    %v581 = vld [vmem:[%s5 + $0x28] sm:$0x3]
    %v582 = vld [vmem:[%s6] sm:$0x1]
    %v584 = vperm.slane %v582, 0
    %v597 = vunpack.c.l.b16 %v571
    %v598 = vunpack.c.l.b16 %v572
    %v599 = vunpack.c.l.b16 %v573
    %v600 = vunpack.c.l.b16 %v574
    %v601 = vunpack.c.l.b16 %v575
    %v602 = vunpack.c.l.b16 %v576
    %v603 = vunpack.c.l.b16 %v577
    %v604 = vunpack.c.l.b16 %v578
    %v605 = vunpack.c.l.b16 %v579
    %v606 = vunpack.c.l.b16 %v580
    %v607 = vunpack.c.l.b16 %v581
    %v608 = vpack.c.b16 %v598, %v597
    %v609 = vpack.c.b16 %v600, %v599
    %v610 = vpack.c.b16 %v602, %v601
    %v611 = vpack.c.b16 %v604, %v603
    %v612 = vpack.c.b16 %v606, %v605
    %v613 = vpack.c.b16 %v607, %v607
    %vm619 = vcmask 687104
    %v621 = vsel %vm619, %v570, 0
    %vm623 = vcmask 1041408
    %v625 = vsel %vm623, %v613, 0
    %627 = vmatpush.bf16.msra.mxu0 0
    %628 = vmatpush.bf16.msra.mxu0 0
    %629 = vmatpush.bf16.msra.mxu0 %v625
    %630 = vmatpush.bf16.msra.mxu0 %v612
    %631 = vmatpush.bf16.msra.mxu0 %v611
    %632 = vmatpush.bf16.msra.mxu0 %v610
    %633 = vmatpush.bf16.msra.mxu0 %v609
    %634 = vmatpush.bf16.msra.mxu0 %v608
    %635 = vmatmul.bf16.gmra.mxu0 %v621
    %v636 = vpop.f32.mrf.mxu0
    %v637 = vadd.f32 %v584, %v636
    %v638 = vpop.f32.mrf.mxu0
    %639 = vdwg.mxu0
    %v640 = vtanh.pop %v637
    %vm641 = vcmask 74752
    %642 = vst.msk [vmem:[#allocation2] sm:$0x3] %vm641, %v640
    // Predicated region
    $region30: #{base_forward.9} parent=1 // pred_check
      _
    $region31: #{base_forward.9} parent=1 // pred_check_branch
      %644 = sbr.rel (0) target = $region33
    $region32: #{base_forward.9} parent=1 // pred_region
      %646 = vsyncadd [#allocation3], 0
      %s648 = sshll.u32 [#allocation2], 4
      %s649 = int_to_ptr.vmem [resolvable:$true] %s648
      %s650 = sshll.u32 %s7, 4
      %s651 = int_to_ptr.hbm [resolvable:$true] %s650
      %653 = dma.vmem_to_hbm [thread:$0]  %s649, 32, %s651, [#allocation3]
    $region33: #{base_forward.9} parent=1 // pred_fallthru
      _
    // Predicated region
    $region34: #{base_forward.9} parent=1 // pred_check
      _
    $region35: #{base_forward.9} parent=1 // pred_check_branch
      %655 = sbr.rel (0) target = $region37
    $region36: #{base_forward.9} parent=1 // pred_region
      %657 = dma.done [#allocation3], 32
    $region37: #{base_forward.9} parent=1 // pred_fallthru
      _
    %658 = vsyncpa [#allocation3], 1

</llo_original>
